<compile_context>
chip_gen: v7x
topology: tpu7x:2x2x1
jax: 0.10.0
libtpu: 0.0.40
codegen_flags: <defaults>
</compile_context>

<pallas_src>
import jax
import jax.numpy as jnp
from jax import lax
from jax.experimental import pallas as pl
from jax.experimental.pallas import tpu as pltpu

N_GRU_STEPS = 5  # the torch forward() loops the GRU 5 times on a 1-token seq


def attn_decoder_kernel(tok_ref,          # SMEM scalar prefetch, shape (1,)
                        emb_ref,          # (1, 1, H)  gathered embedding row
                        h0_ref,           # (1, H)
                        attn_w_ref,       # (2H, L)  attn.weight^T
                        attn_b_ref,       # (1, L)
                        enc_ref,          # (L, H)   encoder_outputs
                        comb_w_ref,       # (2H, H)  attn_combine.weight^T
                        comb_b_ref,       # (1, H)
                        wih_ref,          # (H, 3H)  gru.weight_ih^T  [r|z|n]
                        whh_ref,          # (H, 3H)  gru.weight_hh^T  [r|z|n]
                        bih_ref,          # (1, 3H)
                        bhh_ref,          # (1, 3H)
                        wfused_ref,       # (H, 4H)  [Wir+Whr | Wiz+Whz | Win | Whn]^T
                        bfused_ref,       # (1, 4H)
                        out_w_ref,        # (H, V)   out.weight^T
                        out_b_ref,        # (1, V)
                        logp_ref,         # (1, V)  output: log-probs
                        hid_ref,          # (1, H)  output: new hidden
                        attn_out_ref):    # (1, L)  output: attention weights
    del tok_ref  # token already consumed by the embedding index_map
    H = h0_ref.shape[-1]

    # Embedding lookup: the row was gathered HBM->VMEM by the BlockSpec.
    # TODO(synk): nn.Dropout(p=0.1) on the embedding is treated as identity
    # (inference semantics); training-mode dropout would need pltpu.prng_*.
    embedded = emb_ref[0]        # (1, H)
    h = h0_ref[...]              # (1, H)

    # --- attention weights: softmax(attn(cat(embedded, hidden))) -------------
    eh = jnp.concatenate([embedded, h], axis=-1)                      # (1, 2H)
    attn_logits = (jnp.dot(eh, attn_w_ref[...],
                           preferred_element_type=jnp.float32)
                   + attn_b_ref[...])                                 # (1, L)
    am = jnp.max(attn_logits, axis=-1, keepdims=True)
    ae = jnp.exp(attn_logits - am)
    attn_w = ae / jnp.sum(ae, axis=-1, keepdims=True)                 # (1, L)

    # --- attn_applied = attn_weights @ encoder_outputs ------------------------
    attn_applied = jnp.dot(attn_w, enc_ref[...],
                           preferred_element_type=jnp.float32)        # (1, H)

    # --- attn_combine + ReLU --------------------------------------------------
    ea = jnp.concatenate([embedded, attn_applied], axis=-1)           # (1, 2H)
    x = (jnp.dot(ea, comb_w_ref[...], preferred_element_type=jnp.float32)
         + comb_b_ref[...])
    x = jnp.maximum(x, 0.0)                                           # (1, H)

    # --- GRU step 0 (input != hidden): two (1,H)@(H,3H) dots ------------------
    # torch gate order is (r, z, n).
    gi = jnp.dot(x, wih_ref[...], preferred_element_type=jnp.float32) + bih_ref[...]
    gh = jnp.dot(h, whh_ref[...], preferred_element_type=jnp.float32) + bhh_ref[...]
    r = jax.nn.sigmoid(gi[:, 0:H] + gh[:, 0:H])
    z = jax.nn.sigmoid(gi[:, H:2 * H] + gh[:, H:2 * H])
    n = jnp.tanh(gi[:, 2 * H:3 * H] + r * gh[:, 2 * H:3 * H])
    h = (1.0 - z) * n + z * h

    # --- GRU steps 1..4: input == hidden -> single fused (1,H)@(H,4H) dot -----
    def fused_step(_, h):
        g = (jnp.dot(h, wfused_ref[...], preferred_element_type=jnp.float32)
             + bfused_ref[...])                                       # (1, 4H)
        r = jax.nn.sigmoid(g[:, 0:H])
        z = jax.nn.sigmoid(g[:, H:2 * H])
        n = jnp.tanh(g[:, 2 * H:3 * H] + r * g[:, 3 * H:4 * H])
        return (1.0 - z) * n + z * h

    h = lax.fori_loop(0, N_GRU_STEPS - 1, fused_step, h, unroll=True)

    # --- output projection + log_softmax --------------------------------------
    logits = (jnp.dot(h, out_w_ref[...], preferred_element_type=jnp.float32)
              + out_b_ref[...])                                       # (1, V)
    lm = jnp.max(logits, axis=-1, keepdims=True)
    ls = logits - lm
    logp = ls - jnp.log(jnp.sum(jnp.exp(ls), axis=-1, keepdims=True))

    logp_ref[...] = logp
    hid_ref[...] = h
    attn_out_ref[...] = attn_w


def prepare_params(params):
    """One-time re-layout of torch-style parameters for the kernel (hoisted
    out of the per-call path per the perf review)."""
    (emb, attn_w, attn_b, comb_w, comb_b,
     w_ih, w_hh, b_ih, b_hh, out_w, out_b) = params
    V, H = emb.shape

    emb3 = emb.reshape(V, 1, H)                    # row-gatherable layout
    attn_wT = attn_w.T                             # (2H, L)
    attn_b2 = attn_b.reshape(1, -1)                # (1, L)
    comb_wT = comb_w.T                             # (2H, H)
    comb_b2 = comb_b.reshape(1, H)                 # (1, H)
    wihT = w_ih.T                                  # (H, 3H)  cols = [r | z | n]
    whhT = w_hh.T                                  # (H, 3H)
    bih2 = b_ih.reshape(1, 3 * H)
    bhh2 = b_hh.reshape(1, 3 * H)
    # Fused weights for GRU steps where input == hidden:
    #   g = h @ [W_ir+W_hr | W_iz+W_hz | W_in | W_hn]^T + fused bias
    wfused = jnp.concatenate([wihT[:, 0:H] + whhT[:, 0:H],
                              wihT[:, H:2 * H] + whhT[:, H:2 * H],
                              wihT[:, 2 * H:3 * H],
                              whhT[:, 2 * H:3 * H]], axis=1)          # (H, 4H)
    bfused = jnp.concatenate([bih2[:, 0:H] + bhh2[:, 0:H],
                              bih2[:, H:2 * H] + bhh2[:, H:2 * H],
                              bih2[:, 2 * H:3 * H],
                              bhh2[:, 2 * H:3 * H]], axis=1)          # (1, 4H)
    out_wT = out_w.T                               # (H, V)
    out_b2 = out_b.reshape(1, -1)                  # (1, V)
    return (emb3, attn_wT, attn_b2, comb_wT, comb_b2,
            wihT, whhT, bih2, bhh2, wfused, bfused, out_wT, out_b2)


def attn_decoder_forward(token, hidden, encoder_outputs, prep):
    """token: scalar int32; hidden: (1,1,H); encoder_outputs: (L,H).
    Returns (log_probs (1,V), hidden (1,1,H), attn_weights (1,L))."""
    (emb3, attn_wT, attn_b2, comb_wT, comb_b2,
     wihT, whhT, bih2, bhh2, wfused, bfused, out_wT, out_b2) = prep
    V, _, H = emb3.shape
    L = attn_wT.shape[1]

    tok = jnp.asarray(token, jnp.int32).reshape(1)
    h0 = hidden.reshape(1, H).astype(jnp.float32)
    enc = encoder_outputs.reshape(L, H).astype(jnp.float32)

    def full(shape):
        return pl.BlockSpec(shape, lambda i, tok_ref: (0,) * len(shape))

    grid_spec = pltpu.PrefetchScalarGridSpec(
        num_scalar_prefetch=1,
        grid=(1,),
        in_specs=[
            # embedding row gather via the scalar-prefetched token
            pl.BlockSpec((1, 1, H), lambda i, tok_ref: (tok_ref[0], 0, 0)),
            full((1, H)),            # h0
            full((2 * H, L)),        # attn weight^T
            full((1, L)),            # attn bias
            full((L, H)),            # encoder outputs
            full((2 * H, H)),        # attn_combine weight^T
            full((1, H)),            # attn_combine bias
            full((H, 3 * H)),        # GRU W_ih^T
            full((H, 3 * H)),        # GRU W_hh^T
            full((1, 3 * H)),        # GRU b_ih
            full((1, 3 * H)),        # GRU b_hh
            full((H, 4 * H)),        # fused GRU weights (steps 1..4)
            full((1, 4 * H)),        # fused GRU bias
            full((H, V)),            # out weight^T
            full((1, V)),            # out bias
        ],
        out_specs=[
            full((1, V)),
            full((1, H)),
            full((1, L)),
        ],
    )

    logp, hid, attn_w = pl.pallas_call(
        attn_decoder_kernel,
        out_shape=(jax.ShapeDtypeStruct((1, V), jnp.float32),
                   jax.ShapeDtypeStruct((1, H), jnp.float32),
                   jax.ShapeDtypeStruct((1, L), jnp.float32)),
        grid_spec=grid_spec,
        compiler_params=pltpu.CompilerParams(
            dimension_semantics=("arbitrary",)),
    )(tok, emb3, h0, attn_wT, attn_b2, enc, comb_wT, comb_b2,
      wihT, whhT, bih2, bhh2, wfused, bfused, out_wT, out_b2)

    return logp, hid.reshape(1, 1, H), attn_w


def ref_forward(token, hidden, encoder_outputs, params):
    """Pure-JAX reference mirroring the torch forward exactly (eval-mode dropout)."""
    (emb, attn_w, attn_b, comb_w, comb_b,
     w_ih, w_hh, b_ih, b_hh, out_w, out_b) = params
    H = emb.shape[1]
    embedded = emb[token].reshape(1, H)
    h = hidden.reshape(1, H)
    attn_logits = jnp.concatenate([embedded, h], axis=1) @ attn_w.T + attn_b
    attn_weights = jax.nn.softmax(attn_logits, axis=1)
    attn_applied = attn_weights @ encoder_outputs
    x = jnp.concatenate([embedded, attn_applied], axis=1) @ comb_w.T + comb_b
    x = jax.nn.relu(x)
    for _ in range(N_GRU_STEPS):
        gi = x @ w_ih.T + b_ih
        gh = h @ w_hh.T + b_hh
        i_r, i_z, i_n = jnp.split(gi, 3, axis=1)
        h_r, h_z, h_n = jnp.split(gh, 3, axis=1)
        r = jax.nn.sigmoid(i_r + h_r)
        z = jax.nn.sigmoid(i_z + h_z)
        n = jnp.tanh(i_n + r * h_n)
        h = (1.0 - z) * n + z * h
        x = h
    logits = h @ out_w.T + out_b
    logp = jax.nn.log_softmax(logits, axis=1)
    return logp, h.reshape(1, 1, H), attn_weights


def init_params(key, hidden_size, output_size, max_length):
    ks = jax.random.split(key, 11)
    H, V, L = hidden_size, output_size, max_length
    b_lin = 1.0 / jnp.sqrt(2.0 * H)
    b_gru = 1.0 / jnp.sqrt(1.0 * H)
    emb = jax.random.normal(ks[0], (V, H), jnp.float32)
    attn_w = jax.random.uniform(ks[1], (L, 2 * H), jnp.float32, -b_lin, b_lin)
    attn_b = jax.random.uniform(ks[2], (L,), jnp.float32, -b_lin, b_lin)
    comb_w = jax.random.uniform(ks[3], (H, 2 * H), jnp.float32, -b_lin, b_lin)
    comb_b = jax.random.uniform(ks[4], (H,), jnp.float32, -b_lin, b_lin)
    w_ih = jax.random.uniform(ks[5], (3 * H, H), jnp.float32, -b_gru, b_gru)
    w_hh = jax.random.uniform(ks[6], (3 * H, H), jnp.float32, -b_gru, b_gru)
    b_ih = jax.random.uniform(ks[7], (3 * H,), jnp.float32, -b_gru, b_gru)
    b_hh = jax.random.uniform(ks[8], (3 * H,), jnp.float32, -b_gru, b_gru)
    out_w = jax.random.uniform(ks[9], (V, H), jnp.float32, -b_gru, b_gru)
    out_b = jax.random.uniform(ks[10], (V,), jnp.float32, -b_gru, b_gru)
    return (emb, attn_w, attn_b, comb_w, comb_b,
            w_ih, w_hh, b_ih, b_hh, out_w, out_b)


if __name__ == "__main__":
    hidden_size = 128     # lane-dense small test size (module default is 256)
    output_size = 64      # small vocab
    max_length = 50       # MAX_LENGTH from the module

    key = jax.random.PRNGKey(0)
    kp, kh, ke = jax.random.split(key, 3)
    params = init_params(kp, hidden_size, output_size, max_length)
    prep = prepare_params(params)   # one-time weight re-layout (hoisted)

    token = jnp.int32(3)
    # single-layer GRU => hidden is (1, 1, H); use a small random hidden so the
    # h-dependent attention / gate paths are actually exercised.
    hidden0 = 0.1 * jax.random.normal(kh, (1, 1, hidden_size), jnp.float32)
    encoder_outputs = jax.random.normal(ke, (max_length, hidden_size), jnp.float32)

    logp, hid, attn_w = attn_decoder_forward(token, hidden0, encoder_outputs, prep)
    jax.block_until_ready((logp, hid, attn_w))

    logp_ref, hid_ref, attn_ref = ref_forward(token, hidden0, encoder_outputs, params)
    assert logp.shape == (1, output_size)
    assert hid.shape == (1, 1, hidden_size)
    assert attn_w.shape == (1, max_length)
    assert jnp.allclose(attn_w, attn_ref, atol=1e-5, rtol=1e-5)
    assert jnp.allclose(hid, hid_ref, atol=1e-4, rtol=1e-4)
    assert jnp.allclose(logp, logp_ref, atol=1e-4, rtol=1e-4)

    print("KERNEL_OK")
</pallas_src>

<mosaic_0001>
module attributes {stable_mosaic.version = 11 : i64} {
  func.func @attn_decoder_kernel(%arg0: i32, %arg1: memref<1xi32, #tpu.memory_space<smem>>, %arg2: memref<1x1x128xf32, #tpu.memory_space<vmem>>, %arg3: memref<1x128xf32, #tpu.memory_space<vmem>>, %arg4: memref<256x50xf32, #tpu.memory_space<vmem>>, %arg5: memref<1x50xf32, #tpu.memory_space<vmem>>, %arg6: memref<50x128xf32, #tpu.memory_space<vmem>>, %arg7: memref<256x128xf32, #tpu.memory_space<vmem>>, %arg8: memref<1x128xf32, #tpu.memory_space<vmem>>, %arg9: memref<128x384xf32, #tpu.memory_space<vmem>>, %arg10: memref<128x384xf32, #tpu.memory_space<vmem>>, %arg11: memref<1x384xf32, #tpu.memory_space<vmem>>, %arg12: memref<1x384xf32, #tpu.memory_space<vmem>>, %arg13: memref<128x512xf32, #tpu.memory_space<vmem>>, %arg14: memref<1x512xf32, #tpu.memory_space<vmem>>, %arg15: memref<128x64xf32, #tpu.memory_space<vmem>>, %arg16: memref<1x64xf32, #tpu.memory_space<vmem>>, %arg17: memref<1x64xf32, #tpu.memory_space<vmem>>, %arg18: memref<1x128xf32, #tpu.memory_space<vmem>>, %arg19: memref<1x50xf32, #tpu.memory_space<vmem>>) attributes {dimension_semantics = [#tpu.dimension_semantics<arbitrary>], iteration_bounds = array<i64: 1>, scalar_prefetch = 1 : i64, scratch_operands = 0 : i64, tpu.core_type = #tpu.core_type<tc>, window_params = [{transform_indices = @transform_0, window_bounds = array<i64: 1, 1, 128>}, {pipeline_mode = #tpu.pipeline_mode<synchronous>, transform_indices = @transform_1, window_bounds = array<i64: 1, 128>}, {pipeline_mode = #tpu.pipeline_mode<synchronous>, transform_indices = @transform_2, window_bounds = array<i64: 256, 50>}, {pipeline_mode = #tpu.pipeline_mode<synchronous>, transform_indices = @transform_3, window_bounds = array<i64: 1, 50>}, {pipeline_mode = #tpu.pipeline_mode<synchronous>, transform_indices = @transform_4, window_bounds = array<i64: 50, 128>}, {pipeline_mode = #tpu.pipeline_mode<synchronous>, transform_indices = @transform_5, window_bounds = array<i64: 256, 128>}, {pipeline_mode = #tpu.pipeline_mode<synchronous>, transform_indices = @transform_6, window_bounds = array<i64: 1, 128>}, {pipeline_mode = #tpu.pipeline_mode<synchronous>, transform_indices = @transform_7, window_bounds = array<i64: 128, 384>}, {pipeline_mode = #tpu.pipeline_mode<synchronous>, transform_indices = @transform_8, window_bounds = array<i64: 128, 384>}, {pipeline_mode = #tpu.pipeline_mode<synchronous>, transform_indices = @transform_9, window_bounds = array<i64: 1, 384>}, {pipeline_mode = #tpu.pipeline_mode<synchronous>, transform_indices = @transform_10, window_bounds = array<i64: 1, 384>}, {pipeline_mode = #tpu.pipeline_mode<synchronous>, transform_indices = @transform_11, window_bounds = array<i64: 128, 512>}, {pipeline_mode = #tpu.pipeline_mode<synchronous>, transform_indices = @transform_12, window_bounds = array<i64: 1, 512>}, {pipeline_mode = #tpu.pipeline_mode<synchronous>, transform_indices = @transform_13, window_bounds = array<i64: 128, 64>}, {pipeline_mode = #tpu.pipeline_mode<synchronous>, transform_indices = @transform_14, window_bounds = array<i64: 1, 64>}, {pipeline_mode = #tpu.pipeline_mode<synchronous>, transform_indices = @transform_15, window_bounds = array<i64: 1, 64>}, {pipeline_mode = #tpu.pipeline_mode<synchronous>, transform_indices = @transform_16, window_bounds = array<i64: 1, 128>}, {pipeline_mode = #tpu.pipeline_mode<synchronous>, transform_indices = @transform_17, window_bounds = array<i64: 1, 50>}]} {
    %c0 = arith.constant 0 : index
    %c0_0 = arith.constant 0 : index
    %c0_1 = arith.constant 0 : index
    %0 = vector.load %arg2[%c0, %c0_0, %c0_1] : memref<1x1x128xf32, #tpu.memory_space<vmem>>, vector<1x1x128xf32>
    %1 = vector.shape_cast %0 : vector<1x1x128xf32> to vector<1x128xf32>
    %c0_2 = arith.constant 0 : index
    %c0_3 = arith.constant 0 : index
    %2 = vector.load %arg3[%c0_2, %c0_3] : memref<1x128xf32, #tpu.memory_space<vmem>>, vector<1x128xf32>
    %3 = tpu.concatenate %1, %2 in 1 : vector<1x128xf32>, vector<1x128xf32> -> vector<1x256xf32>
    %c0_4 = arith.constant 0 : index
    %c0_5 = arith.constant 0 : index
    %4 = vector.load %arg4[%c0_4, %c0_5] : memref<256x50xf32, #tpu.memory_space<vmem>>, vector<256x50xf32>
    %cst = arith.constant dense<0.000000e+00> : vector<1x50xf32>
    %5 = tpu.matmul %3, %4, %cst {dimension_numbers = #tpu.dot_dimension_numbers<[1], [0], [0], [1], [0, 0, 1, 1], [], []>} : vector<1x256xf32>, vector<256x50xf32>, vector<1x50xf32> -> vector<1x50xf32>
    %c0_6 = arith.constant 0 : index
    %c0_7 = arith.constant 0 : index
    %6 = vector.load %arg5[%c0_6, %c0_7] : memref<1x50xf32, #tpu.memory_space<vmem>>, vector<1x50xf32>
    %7 = arith.addf %5, %6 : vector<1x50xf32>
    %cst_8 = arith.constant dense<0xFF800000> : vector<1xf32>
    %8 = vector.multi_reduction <maximumf>, %7, %cst_8 [1] : vector<1x50xf32> to vector<1xf32>
    %9 = vector.shape_cast %8 : vector<1xf32> to vector<1x1xf32>
    %10 = vector.broadcast %9 : vector<1x1xf32> to vector<1x50xf32>
    %11 = arith.subf %7, %10 : vector<1x50xf32>
    %12 = math.exp %11 : vector<1x50xf32>
    %cst_9 = arith.constant dense<0.000000e+00> : vector<1xf32>
    %13 = vector.multi_reduction <add>, %12, %cst_9 [1] : vector<1x50xf32> to vector<1xf32>
    %14 = vector.shape_cast %13 : vector<1xf32> to vector<1x1xf32>
    %15 = vector.broadcast %14 : vector<1x1xf32> to vector<1x50xf32>
    %16 = arith.divf %12, %15 : vector<1x50xf32>
    %c0_10 = arith.constant 0 : index
    %c0_11 = arith.constant 0 : index
    %17 = vector.load %arg6[%c0_10, %c0_11] : memref<50x128xf32, #tpu.memory_space<vmem>>, vector<50x128xf32>
    %cst_12 = arith.constant dense<0.000000e+00> : vector<1x128xf32>
    %18 = tpu.matmul %16, %17, %cst_12 {dimension_numbers = #tpu.dot_dimension_numbers<[1], [0], [0], [1], [0, 0, 1, 1], [], []>} : vector<1x50xf32>, vector<50x128xf32>, vector<1x128xf32> -> vector<1x128xf32>
    %19 = tpu.concatenate %1, %18 in 1 : vector<1x128xf32>, vector<1x128xf32> -> vector<1x256xf32>
    %c0_13 = arith.constant 0 : index
    %c0_14 = arith.constant 0 : index
    %20 = vector.load %arg7[%c0_13, %c0_14] : memref<256x128xf32, #tpu.memory_space<vmem>>, vector<256x128xf32>
    %cst_15 = arith.constant dense<0.000000e+00> : vector<1x128xf32>
    %21 = tpu.matmul %19, %20, %cst_15 {dimension_numbers = #tpu.dot_dimension_numbers<[1], [0], [0], [1], [0, 0, 1, 1], [], []>} : vector<1x256xf32>, vector<256x128xf32>, vector<1x128xf32> -> vector<1x128xf32>
    %c0_16 = arith.constant 0 : index
    %c0_17 = arith.constant 0 : index
    %22 = vector.load %arg8[%c0_16, %c0_17] : memref<1x128xf32, #tpu.memory_space<vmem>>, vector<1x128xf32>
    %23 = arith.addf %21, %22 : vector<1x128xf32>
    %cst_18 = arith.constant 0.000000e+00 : f32
    %24 = vector.broadcast %cst_18 : f32 to vector<1x128xf32>
    %25 = arith.maximumf %23, %24 : vector<1x128xf32>
    %c0_19 = arith.constant 0 : index
    %c0_20 = arith.constant 0 : index
    %26 = vector.load %arg9[%c0_19, %c0_20] : memref<128x384xf32, #tpu.memory_space<vmem>>, vector<128x384xf32>
    %cst_21 = arith.constant dense<0.000000e+00> : vector<1x384xf32>
    %27 = tpu.matmul %25, %26, %cst_21 {dimension_numbers = #tpu.dot_dimension_numbers<[1], [0], [0], [1], [0, 0, 1, 1], [], []>} : vector<1x128xf32>, vector<128x384xf32>, vector<1x384xf32> -> vector<1x384xf32>
    %c0_22 = arith.constant 0 : index
    %c0_23 = arith.constant 0 : index
    %28 = vector.load %arg11[%c0_22, %c0_23] : memref<1x384xf32, #tpu.memory_space<vmem>>, vector<1x384xf32>
    %29 = arith.addf %27, %28 : vector<1x384xf32>
    %c0_24 = arith.constant 0 : index
    %c0_25 = arith.constant 0 : index
    %30 = vector.load %arg10[%c0_24, %c0_25] : memref<128x384xf32, #tpu.memory_space<vmem>>, vector<128x384xf32>
    %cst_26 = arith.constant dense<0.000000e+00> : vector<1x384xf32>
    %31 = tpu.matmul %2, %30, %cst_26 {dimension_numbers = #tpu.dot_dimension_numbers<[1], [0], [0], [1], [0, 0, 1, 1], [], []>} : vector<1x128xf32>, vector<128x384xf32>, vector<1x384xf32> -> vector<1x384xf32>
    %c0_27 = arith.constant 0 : index
    %c0_28 = arith.constant 0 : index
    %32 = vector.load %arg12[%c0_27, %c0_28] : memref<1x384xf32, #tpu.memory_space<vmem>>, vector<1x384xf32>
    %33 = arith.addf %31, %32 : vector<1x384xf32>
    %34 = vector.extract_strided_slice %29 {offsets = [0, 0], sizes = [1, 128], strides = [1, 1]} : vector<1x384xf32> to vector<1x128xf32>
    %35 = vector.extract_strided_slice %33 {offsets = [0, 0], sizes = [1, 128], strides = [1, 1]} : vector<1x384xf32> to vector<1x128xf32>
    %36 = arith.addf %34, %35 : vector<1x128xf32>
    %37 = arith.negf %36 : vector<1x128xf32>
    %38 = math.exp %37 : vector<1x128xf32>
    %cst_29 = arith.constant 1.000000e+00 : f32
    %39 = vector.broadcast %cst_29 : f32 to vector<1x128xf32>
    %40 = arith.addf %39, %38 : vector<1x128xf32>
    %41 = arith.divf %39, %40 : vector<1x128xf32>
    %42 = vector.extract_strided_slice %29 {offsets = [0, 128], sizes = [1, 128], strides = [1, 1]} : vector<1x384xf32> to vector<1x128xf32>
    %43 = vector.extract_strided_slice %33 {offsets = [0, 128], sizes = [1, 128], strides = [1, 1]} : vector<1x384xf32> to vector<1x128xf32>
    %44 = arith.addf %42, %43 : vector<1x128xf32>
    %45 = arith.negf %44 : vector<1x128xf32>
    %46 = math.exp %45 : vector<1x128xf32>
    %cst_30 = arith.constant 1.000000e+00 : f32
    %47 = vector.broadcast %cst_30 : f32 to vector<1x128xf32>
    %48 = arith.addf %47, %46 : vector<1x128xf32>
    %49 = arith.divf %47, %48 : vector<1x128xf32>
    %50 = vector.extract_strided_slice %29 {offsets = [0, 256], sizes = [1, 128], strides = [1, 1]} : vector<1x384xf32> to vector<1x128xf32>
    %51 = vector.extract_strided_slice %33 {offsets = [0, 256], sizes = [1, 128], strides = [1, 1]} : vector<1x384xf32> to vector<1x128xf32>
    %52 = arith.mulf %41, %51 : vector<1x128xf32>
    %53 = arith.addf %50, %52 : vector<1x128xf32>
    %54 = math.tanh %53 : vector<1x128xf32>
    %cst_31 = arith.constant 1.000000e+00 : f32
    %55 = vector.broadcast %cst_31 : f32 to vector<1x128xf32>
    %56 = arith.subf %55, %49 : vector<1x128xf32>
    %57 = arith.mulf %56, %54 : vector<1x128xf32>
    %58 = arith.mulf %49, %2 : vector<1x128xf32>
    %59 = arith.addf %57, %58 : vector<1x128xf32>
    %c0_i32 = arith.constant 0 : i32
    %c0_32 = arith.constant 0 : index
    %c0_33 = arith.constant 0 : index
    %60 = vector.load %arg13[%c0_32, %c0_33] : memref<128x512xf32, #tpu.memory_space<vmem>>, vector<128x512xf32>
    %cst_34 = arith.constant dense<0.000000e+00> : vector<1x512xf32>
    %61 = tpu.matmul %59, %60, %cst_34 {dimension_numbers = #tpu.dot_dimension_numbers<[1], [0], [0], [1], [0, 0, 1, 1], [], []>} : vector<1x128xf32>, vector<128x512xf32>, vector<1x512xf32> -> vector<1x512xf32>
    %c0_35 = arith.constant 0 : index
    %c0_36 = arith.constant 0 : index
    %62 = vector.load %arg14[%c0_35, %c0_36] : memref<1x512xf32, #tpu.memory_space<vmem>>, vector<1x512xf32>
    %63 = arith.addf %61, %62 : vector<1x512xf32>
    %64 = vector.extract_strided_slice %63 {offsets = [0, 0], sizes = [1, 128], strides = [1, 1]} : vector<1x512xf32> to vector<1x128xf32>
    %65 = arith.negf %64 : vector<1x128xf32>
    %66 = math.exp %65 : vector<1x128xf32>
    %cst_37 = arith.constant 1.000000e+00 : f32
    %67 = vector.broadcast %cst_37 : f32 to vector<1x128xf32>
    %68 = arith.addf %67, %66 : vector<1x128xf32>
    %69 = arith.divf %67, %68 : vector<1x128xf32>
    %70 = vector.extract_strided_slice %63 {offsets = [0, 128], sizes = [1, 128], strides = [1, 1]} : vector<1x512xf32> to vector<1x128xf32>
    %71 = arith.negf %70 : vector<1x128xf32>
    %72 = math.exp %71 : vector<1x128xf32>
    %cst_38 = arith.constant 1.000000e+00 : f32
    %73 = vector.broadcast %cst_38 : f32 to vector<1x128xf32>
    %74 = arith.addf %73, %72 : vector<1x128xf32>
    %75 = arith.divf %73, %74 : vector<1x128xf32>
    %76 = vector.extract_strided_slice %63 {offsets = [0, 256], sizes = [1, 128], strides = [1, 1]} : vector<1x512xf32> to vector<1x128xf32>
    %77 = vector.extract_strided_slice %63 {offsets = [0, 384], sizes = [1, 128], strides = [1, 1]} : vector<1x512xf32> to vector<1x128xf32>
    %78 = arith.mulf %69, %77 : vector<1x128xf32>
    %79 = arith.addf %76, %78 : vector<1x128xf32>
    %80 = math.tanh %79 : vector<1x128xf32>
    %cst_39 = arith.constant 1.000000e+00 : f32
    %81 = vector.broadcast %cst_39 : f32 to vector<1x128xf32>
    %82 = arith.subf %81, %75 : vector<1x128xf32>
    %83 = arith.mulf %82, %80 : vector<1x128xf32>
    %84 = arith.mulf %75, %59 : vector<1x128xf32>
    %85 = arith.addf %83, %84 : vector<1x128xf32>
    %c1_i32 = arith.constant 1 : i32
    %c0_40 = arith.constant 0 : index
    %c0_41 = arith.constant 0 : index
    %86 = vector.load %arg13[%c0_40, %c0_41] : memref<128x512xf32, #tpu.memory_space<vmem>>, vector<128x512xf32>
    %cst_42 = arith.constant dense<0.000000e+00> : vector<1x512xf32>
    %87 = tpu.matmul %85, %86, %cst_42 {dimension_numbers = #tpu.dot_dimension_numbers<[1], [0], [0], [1], [0, 0, 1, 1], [], []>} : vector<1x128xf32>, vector<128x512xf32>, vector<1x512xf32> -> vector<1x512xf32>
    %c0_43 = arith.constant 0 : index
    %c0_44 = arith.constant 0 : index
    %88 = vector.load %arg14[%c0_43, %c0_44] : memref<1x512xf32, #tpu.memory_space<vmem>>, vector<1x512xf32>
    %89 = arith.addf %87, %88 : vector<1x512xf32>
    %90 = vector.extract_strided_slice %89 {offsets = [0, 0], sizes = [1, 128], strides = [1, 1]} : vector<1x512xf32> to vector<1x128xf32>
    %91 = arith.negf %90 : vector<1x128xf32>
    %92 = math.exp %91 : vector<1x128xf32>
    %cst_45 = arith.constant 1.000000e+00 : f32
    %93 = vector.broadcast %cst_45 : f32 to vector<1x128xf32>
    %94 = arith.addf %93, %92 : vector<1x128xf32>
    %95 = arith.divf %93, %94 : vector<1x128xf32>
    %96 = vector.extract_strided_slice %89 {offsets = [0, 128], sizes = [1, 128], strides = [1, 1]} : vector<1x512xf32> to vector<1x128xf32>
    %97 = arith.negf %96 : vector<1x128xf32>
    %98 = math.exp %97 : vector<1x128xf32>
    %cst_46 = arith.constant 1.000000e+00 : f32
    %99 = vector.broadcast %cst_46 : f32 to vector<1x128xf32>
    %100 = arith.addf %99, %98 : vector<1x128xf32>
    %101 = arith.divf %99, %100 : vector<1x128xf32>
    %102 = vector.extract_strided_slice %89 {offsets = [0, 256], sizes = [1, 128], strides = [1, 1]} : vector<1x512xf32> to vector<1x128xf32>
    %103 = vector.extract_strided_slice %89 {offsets = [0, 384], sizes = [1, 128], strides = [1, 1]} : vector<1x512xf32> to vector<1x128xf32>
    %104 = arith.mulf %95, %103 : vector<1x128xf32>
    %105 = arith.addf %102, %104 : vector<1x128xf32>
    %106 = math.tanh %105 : vector<1x128xf32>
    %cst_47 = arith.constant 1.000000e+00 : f32
    %107 = vector.broadcast %cst_47 : f32 to vector<1x128xf32>
    %108 = arith.subf %107, %101 : vector<1x128xf32>
    %109 = arith.mulf %108, %106 : vector<1x128xf32>
    %110 = arith.mulf %101, %85 : vector<1x128xf32>
    %111 = arith.addf %109, %110 : vector<1x128xf32>
    %c2_i32 = arith.constant 2 : i32
    %c0_48 = arith.constant 0 : index
    %c0_49 = arith.constant 0 : index
    %112 = vector.load %arg13[%c0_48, %c0_49] : memref<128x512xf32, #tpu.memory_space<vmem>>, vector<128x512xf32>
    %cst_50 = arith.constant dense<0.000000e+00> : vector<1x512xf32>
    %113 = tpu.matmul %111, %112, %cst_50 {dimension_numbers = #tpu.dot_dimension_numbers<[1], [0], [0], [1], [0, 0, 1, 1], [], []>} : vector<1x128xf32>, vector<128x512xf32>, vector<1x512xf32> -> vector<1x512xf32>
    %c0_51 = arith.constant 0 : index
    %c0_52 = arith.constant 0 : index
    %114 = vector.load %arg14[%c0_51, %c0_52] : memref<1x512xf32, #tpu.memory_space<vmem>>, vector<1x512xf32>
    %115 = arith.addf %113, %114 : vector<1x512xf32>
    %116 = vector.extract_strided_slice %115 {offsets = [0, 0], sizes = [1, 128], strides = [1, 1]} : vector<1x512xf32> to vector<1x128xf32>
    %117 = arith.negf %116 : vector<1x128xf32>
    %118 = math.exp %117 : vector<1x128xf32>
    %cst_53 = arith.constant 1.000000e+00 : f32
    %119 = vector.broadcast %cst_53 : f32 to vector<1x128xf32>
    %120 = arith.addf %119, %118 : vector<1x128xf32>
    %121 = arith.divf %119, %120 : vector<1x128xf32>
    %122 = vector.extract_strided_slice %115 {offsets = [0, 128], sizes = [1, 128], strides = [1, 1]} : vector<1x512xf32> to vector<1x128xf32>
    %123 = arith.negf %122 : vector<1x128xf32>
    %124 = math.exp %123 : vector<1x128xf32>
    %cst_54 = arith.constant 1.000000e+00 : f32
    %125 = vector.broadcast %cst_54 : f32 to vector<1x128xf32>
    %126 = arith.addf %125, %124 : vector<1x128xf32>
    %127 = arith.divf %125, %126 : vector<1x128xf32>
    %128 = vector.extract_strided_slice %115 {offsets = [0, 256], sizes = [1, 128], strides = [1, 1]} : vector<1x512xf32> to vector<1x128xf32>
    %129 = vector.extract_strided_slice %115 {offsets = [0, 384], sizes = [1, 128], strides = [1, 1]} : vector<1x512xf32> to vector<1x128xf32>
    %130 = arith.mulf %121, %129 : vector<1x128xf32>
    %131 = arith.addf %128, %130 : vector<1x128xf32>
    %132 = math.tanh %131 : vector<1x128xf32>
    %cst_55 = arith.constant 1.000000e+00 : f32
    %133 = vector.broadcast %cst_55 : f32 to vector<1x128xf32>
    %134 = arith.subf %133, %127 : vector<1x128xf32>
    %135 = arith.mulf %134, %132 : vector<1x128xf32>
    %136 = arith.mulf %127, %111 : vector<1x128xf32>
    %137 = arith.addf %135, %136 : vector<1x128xf32>
    %c3_i32 = arith.constant 3 : i32
    %c0_56 = arith.constant 0 : index
    %c0_57 = arith.constant 0 : index
    %138 = vector.load %arg13[%c0_56, %c0_57] : memref<128x512xf32, #tpu.memory_space<vmem>>, vector<128x512xf32>
    %cst_58 = arith.constant dense<0.000000e+00> : vector<1x512xf32>
    %139 = tpu.matmul %137, %138, %cst_58 {dimension_numbers = #tpu.dot_dimension_numbers<[1], [0], [0], [1], [0, 0, 1, 1], [], []>} : vector<1x128xf32>, vector<128x512xf32>, vector<1x512xf32> -> vector<1x512xf32>
    %c0_59 = arith.constant 0 : index
    %c0_60 = arith.constant 0 : index
    %140 = vector.load %arg14[%c0_59, %c0_60] : memref<1x512xf32, #tpu.memory_space<vmem>>, vector<1x512xf32>
    %141 = arith.addf %139, %140 : vector<1x512xf32>
    %142 = vector.extract_strided_slice %141 {offsets = [0, 0], sizes = [1, 128], strides = [1, 1]} : vector<1x512xf32> to vector<1x128xf32>
    %143 = arith.negf %142 : vector<1x128xf32>
    %144 = math.exp %143 : vector<1x128xf32>
    %cst_61 = arith.constant 1.000000e+00 : f32
    %145 = vector.broadcast %cst_61 : f32 to vector<1x128xf32>
    %146 = arith.addf %145, %144 : vector<1x128xf32>
    %147 = arith.divf %145, %146 : vector<1x128xf32>
    %148 = vector.extract_strided_slice %141 {offsets = [0, 128], sizes = [1, 128], strides = [1, 1]} : vector<1x512xf32> to vector<1x128xf32>
    %149 = arith.negf %148 : vector<1x128xf32>
    %150 = math.exp %149 : vector<1x128xf32>
    %cst_62 = arith.constant 1.000000e+00 : f32
    %151 = vector.broadcast %cst_62 : f32 to vector<1x128xf32>
    %152 = arith.addf %151, %150 : vector<1x128xf32>
    %153 = arith.divf %151, %152 : vector<1x128xf32>
    %154 = vector.extract_strided_slice %141 {offsets = [0, 256], sizes = [1, 128], strides = [1, 1]} : vector<1x512xf32> to vector<1x128xf32>
    %155 = vector.extract_strided_slice %141 {offsets = [0, 384], sizes = [1, 128], strides = [1, 1]} : vector<1x512xf32> to vector<1x128xf32>
    %156 = arith.mulf %147, %155 : vector<1x128xf32>
    %157 = arith.addf %154, %156 : vector<1x128xf32>
    %158 = math.tanh %157 : vector<1x128xf32>
    %cst_63 = arith.constant 1.000000e+00 : f32
    %159 = vector.broadcast %cst_63 : f32 to vector<1x128xf32>
    %160 = arith.subf %159, %153 : vector<1x128xf32>
    %161 = arith.mulf %160, %158 : vector<1x128xf32>
    %162 = arith.mulf %153, %137 : vector<1x128xf32>
    %163 = arith.addf %161, %162 : vector<1x128xf32>
    %c0_64 = arith.constant 0 : index
    %c0_65 = arith.constant 0 : index
    %164 = vector.load %arg15[%c0_64, %c0_65] : memref<128x64xf32, #tpu.memory_space<vmem>>, vector<128x64xf32>
    %cst_66 = arith.constant dense<0.000000e+00> : vector<1x64xf32>
    %165 = tpu.matmul %163, %164, %cst_66 {dimension_numbers = #tpu.dot_dimension_numbers<[1], [0], [0], [1], [0, 0, 1, 1], [], []>} : vector<1x128xf32>, vector<128x64xf32>, vector<1x64xf32> -> vector<1x64xf32>
    %c0_67 = arith.constant 0 : index
    %c0_68 = arith.constant 0 : index
    %166 = vector.load %arg16[%c0_67, %c0_68] : memref<1x64xf32, #tpu.memory_space<vmem>>, vector<1x64xf32>
    %167 = arith.addf %165, %166 : vector<1x64xf32>
    %cst_69 = arith.constant dense<0xFF800000> : vector<1xf32>
    %168 = vector.multi_reduction <maximumf>, %167, %cst_69 [1] : vector<1x64xf32> to vector<1xf32>
    %169 = vector.shape_cast %168 : vector<1xf32> to vector<1x1xf32>
    %170 = vector.broadcast %169 : vector<1x1xf32> to vector<1x64xf32>
    %171 = arith.subf %167, %170 : vector<1x64xf32>
    %172 = math.exp %171 : vector<1x64xf32>
    %cst_70 = arith.constant dense<0.000000e+00> : vector<1xf32>
    %173 = vector.multi_reduction <add>, %172, %cst_70 [1] : vector<1x64xf32> to vector<1xf32>
    %174 = vector.shape_cast %173 : vector<1xf32> to vector<1x1xf32>
    %175 = math.log %174 : vector<1x1xf32>
    %176 = vector.broadcast %175 : vector<1x1xf32> to vector<1x64xf32>
    %177 = arith.subf %171, %176 : vector<1x64xf32>
    %c0_71 = arith.constant 0 : index
    %c0_72 = arith.constant 0 : index
    %178 = vector.load %arg17[%c0_71, %c0_72] : memref<1x64xf32, #tpu.memory_space<vmem>>, vector<1x64xf32>
    tpu.vector_store %arg17[%c0_71, %c0_72], %177 {strides = array<i32>} : memref<1x64xf32, #tpu.memory_space<vmem>>, vector<1x64xf32>,
    %c0_73 = arith.constant 0 : index
    %c0_74 = arith.constant 0 : index
    %179 = vector.load %arg18[%c0_73, %c0_74] : memref<1x128xf32, #tpu.memory_space<vmem>>, vector<1x128xf32>
    tpu.vector_store %arg18[%c0_73, %c0_74], %163 {strides = array<i32>} : memref<1x128xf32, #tpu.memory_space<vmem>>, vector<1x128xf32>,
    %c0_75 = arith.constant 0 : index
    %c0_76 = arith.constant 0 : index
    %180 = vector.load %arg19[%c0_75, %c0_76] : memref<1x50xf32, #tpu.memory_space<vmem>>, vector<1x50xf32>
    tpu.vector_store %arg19[%c0_75, %c0_76], %16 {strides = array<i32>} : memref<1x50xf32, #tpu.memory_space<vmem>>, vector<1x50xf32>,
    return
  }
  func.func @transform_0(%arg0: i32, %arg1: memref<1xi32, #tpu.memory_space<smem>>) -> (i32, i32, i32) {
    %c0 = arith.constant 0 : index
    %0 = memref.load %arg1[%c0] : memref<1xi32, #tpu.memory_space<smem>>
    %c0_i32 = arith.constant 0 : i32
    %c0_i32_0 = arith.constant 0 : i32
    %c0_i32_1 = arith.constant 0 : i32
    return %0, %c0_i32, %c0_i32_0 : i32, i32, i32
  }
  func.func @transform_1(%arg0: i32, %arg1: memref<1xi32, #tpu.memory_space<smem>>) -> (i32, i32) {
    %c0_i32 = arith.constant 0 : i32
    %c0_i32_0 = arith.constant 0 : i32
    %c0_i32_1 = arith.constant 0 : i32
    return %c0_i32, %c0_i32_0 : i32, i32
  }
  func.func @transform_2(%arg0: i32, %arg1: memref<1xi32, #tpu.memory_space<smem>>) -> (i32, i32) {
    %c0_i32 = arith.constant 0 : i32
    %c0_i32_0 = arith.constant 0 : i32
    %c0_i32_1 = arith.constant 0 : i32
    return %c0_i32, %c0_i32_0 : i32, i32
  }
  func.func @transform_3(%arg0: i32, %arg1: memref<1xi32, #tpu.memory_space<smem>>) -> (i32, i32) {
    %c0_i32 = arith.constant 0 : i32
    %c0_i32_0 = arith.constant 0 : i32
    %c0_i32_1 = arith.constant 0 : i32
    return %c0_i32, %c0_i32_0 : i32, i32
  }
  func.func @transform_4(%arg0: i32, %arg1: memref<1xi32, #tpu.memory_space<smem>>) -> (i32, i32) {
    %c0_i32 = arith.constant 0 : i32
    %c0_i32_0 = arith.constant 0 : i32
    %c0_i32_1 = arith.constant 0 : i32
    return %c0_i32, %c0_i32_0 : i32, i32
  }
  func.func @transform_5(%arg0: i32, %arg1: memref<1xi32, #tpu.memory_space<smem>>) -> (i32, i32) {
    %c0_i32 = arith.constant 0 : i32
    %c0_i32_0 = arith.constant 0 : i32
    %c0_i32_1 = arith.constant 0 : i32
    return %c0_i32, %c0_i32_0 : i32, i32
  }
  func.func @transform_6(%arg0: i32, %arg1: memref<1xi32, #tpu.memory_space<smem>>) -> (i32, i32) {
    %c0_i32 = arith.constant 0 : i32
    %c0_i32_0 = arith.constant 0 : i32
    %c0_i32_1 = arith.constant 0 : i32
    return %c0_i32, %c0_i32_0 : i32, i32
  }
  func.func @transform_7(%arg0: i32, %arg1: memref<1xi32, #tpu.memory_space<smem>>) -> (i32, i32) {
    %c0_i32 = arith.constant 0 : i32
    %c0_i32_0 = arith.constant 0 : i32
    %c0_i32_1 = arith.constant 0 : i32
    return %c0_i32, %c0_i32_0 : i32, i32
  }
  func.func @transform_8(%arg0: i32, %arg1: memref<1xi32, #tpu.memory_space<smem>>) -> (i32, i32) {
    %c0_i32 = arith.constant 0 : i32
    %c0_i32_0 = arith.constant 0 : i32
    %c0_i32_1 = arith.constant 0 : i32
    return %c0_i32, %c0_i32_0 : i32, i32
  }
  func.func @transform_9(%arg0: i32, %arg1: memref<1xi32, #tpu.memory_space<smem>>) -> (i32, i32) {
    %c0_i32 = arith.constant 0 : i32
    %c0_i32_0 = arith.constant 0 : i32
    %c0_i32_1 = arith.constant 0 : i32
    return %c0_i32, %c0_i32_0 : i32, i32
  }
  func.func @transform_10(%arg0: i32, %arg1: memref<1xi32, #tpu.memory_space<smem>>) -> (i32, i32) {
    %c0_i32 = arith.constant 0 : i32
    %c0_i32_0 = arith.constant 0 : i32
    %c0_i32_1 = arith.constant 0 : i32
    return %c0_i32, %c0_i32_0 : i32, i32
  }
  func.func @transform_11(%arg0: i32, %arg1: memref<1xi32, #tpu.memory_space<smem>>) -> (i32, i32) {
    %c0_i32 = arith.constant 0 : i32
    %c0_i32_0 = arith.constant 0 : i32
    %c0_i32_1 = arith.constant 0 : i32
    return %c0_i32, %c0_i32_0 : i32, i32
  }
  func.func @transform_12(%arg0: i32, %arg1: memref<1xi32, #tpu.memory_space<smem>>) -> (i32, i32) {
    %c0_i32 = arith.constant 0 : i32
    %c0_i32_0 = arith.constant 0 : i32
    %c0_i32_1 = arith.constant 0 : i32
    return %c0_i32, %c0_i32_0 : i32, i32
  }
  func.func @transform_13(%arg0: i32, %arg1: memref<1xi32, #tpu.memory_space<smem>>) -> (i32, i32) {
    %c0_i32 = arith.constant 0 : i32
    %c0_i32_0 = arith.constant 0 : i32
    %c0_i32_1 = arith.constant 0 : i32
    return %c0_i32, %c0_i32_0 : i32, i32
  }
  func.func @transform_14(%arg0: i32, %arg1: memref<1xi32, #tpu.memory_space<smem>>) -> (i32, i32) {
    %c0_i32 = arith.constant 0 : i32
    %c0_i32_0 = arith.constant 0 : i32
    %c0_i32_1 = arith.constant 0 : i32
    return %c0_i32, %c0_i32_0 : i32, i32
  }
  func.func @transform_15(%arg0: i32, %arg1: memref<1xi32, #tpu.memory_space<smem>>) -> (i32, i32) {
    %c0_i32 = arith.constant 0 : i32
    %c0_i32_0 = arith.constant 0 : i32
    %c0_i32_1 = arith.constant 0 : i32
    return %c0_i32, %c0_i32_0 : i32, i32
  }
  func.func @transform_16(%arg0: i32, %arg1: memref<1xi32, #tpu.memory_space<smem>>) -> (i32, i32) {
    %c0_i32 = arith.constant 0 : i32
    %c0_i32_0 = arith.constant 0 : i32
    %c0_i32_1 = arith.constant 0 : i32
    return %c0_i32, %c0_i32_0 : i32, i32
  }
  func.func @transform_17(%arg0: i32, %arg1: memref<1xi32, #tpu.memory_space<smem>>) -> (i32, i32) {
    %c0_i32 = arith.constant 0 : i32
    %c0_i32_0 = arith.constant 0 : i32
    %c0_i32_1 = arith.constant 0 : i32
    return %c0_i32, %c0_i32_0 : i32, i32
  }
}

</mosaic_0001>

<llo_original>
// kernel: tpu_custom_call.1
$region0: #{tpu_custom_call.1}
  #allocation0 [shape = 'u32[]', space=smem, size = 0x4, offset = 0x4, fixed_abs, tag = 'smem constant byte address 0x4 - core index']
  #allocation1 [shape = 'u32[144,128]{1,0:T(1,128)}', space=vmem, size = 0x12000, scoped, tag = 'internal scratch']
  #allocation2 [shape = 's32[1]{0}', space=sflag, size = 0x4, scoped, tag = 'scoped memory for tpu_custom_call.1']
  #allocation3 [shape = 's32[1]{0:T(128)S(6)}', space=smem, size = 0x200, scoped, tag = 'prefetched SMEM operand 0']
  %s0 = inlined_call_operand.<no memory space> [shape: s32[1], index: 0, kind: input, shape index: {}]
  %s1 = inlined_call_operand.vmem [shape: f32[64,1,128], index: 1, kind: input, shape index: {}]
  %s2 = inlined_call_operand.vmem [shape: f32[1,128], index: 2, kind: input, shape index: {}]
  %s3 = inlined_call_operand.vmem [shape: f32[256,50], index: 3, kind: input, shape index: {}]
  %s4 = inlined_call_operand.vmem [shape: f32[1,50], index: 4, kind: input, shape index: {}]
  %s5 = inlined_call_operand.hbm [shape: f32[50,128], index: 5, kind: input, shape index: {}]
  %s6 = inlined_call_operand.hbm [shape: f32[256,128], index: 6, kind: input, shape index: {}]
  %s7 = inlined_call_operand.vmem [shape: f32[1,128], index: 7, kind: input, shape index: {}]
  %s8 = inlined_call_operand.hbm [shape: f32[128,384], index: 8, kind: input, shape index: {}]
  %s9 = inlined_call_operand.hbm [shape: f32[128,384], index: 9, kind: input, shape index: {}]
  %s10 = inlined_call_operand.vmem [shape: f32[1,384], index: 10, kind: input, shape index: {}]
  %s11 = inlined_call_operand.vmem [shape: f32[1,384], index: 11, kind: input, shape index: {}]
  %s12 = inlined_call_operand.vmem [shape: f32[128,512], index: 12, kind: input, shape index: {}]
  %s13 = inlined_call_operand.vmem [shape: f32[1,512], index: 13, kind: input, shape index: {}]
  %s14 = inlined_call_operand.vmem [shape: f32[128,64], index: 14, kind: input, shape index: {}]
  %s15 = inlined_call_operand.vmem [shape: f32[1,64], index: 15, kind: input, shape index: {}]
  %s16 = inlined_call_operand.hbm [shape: f32[1,64], index: 16, kind: output, shape index: {0}]
  %s17 = inlined_call_operand.hbm [shape: f32[1,128], index: 17, kind: output, shape index: {1}]
  %s18 = inlined_call_operand.hbm [shape: f32[1,50], index: 18, kind: output, shape index: {2}]
  %19 = xla_tuple %s16, %s17, %s18
  %s20 = sld [smem:[#allocation0]]
  $region102: #{tpu_custom_call.1} parent=0
    _
  %s22 = ssub.s32 1, %s20
  %s23 = scalar_select 0, %s22, %s20
  %24 = sst [smem:[#allocation3]] %s0
  $region1: #{tpu_custom_call.1} parent=0
    #allocation4 [shape = 'u8[28672]{0}', space=vmem, size = 0x7000, scoped, tag = 'input window, operand 5, single buffered']
    #allocation5 [shape = 's32[1]{0}', space=sflag, size = 0x4, scoped, tag = 'scoped memory for tpu_custom_call.1']
    #allocation6 [shape = 's32[1]{0}', space=sflag, size = 0x4, scoped, tag = 'scoped memory for tpu_custom_call.1']
    #allocation7 [shape = 'u8[131072]{0}', space=vmem, size = 0x20000, scoped, tag = 'input window, operand 6, single buffered']
    #allocation8 [shape = 's32[1]{0}', space=sflag, size = 0x4, scoped, tag = 'scoped memory for tpu_custom_call.1']
    #allocation9 [shape = 'u8[196608]{0}', space=vmem, size = 0x30000, scoped, tag = 'input window, operand 8, single buffered']
    #allocation10 [shape = 'u8[196608]{0}', space=vmem, size = 0x30000, scoped, tag = 'input window, operand 9, single buffered']
    #allocation11 [shape = 's32[1]{0}', space=sflag, size = 0x4, scoped, tag = 'scoped memory for tpu_custom_call.1']
    #allocation12 [shape = 'u8[512]{0}', space=vmem, size = 0x400, scoped, tag = 'output window, operand 0, single buffered']
    #allocation13 [shape = 'u8[512]{0}', space=vmem, size = 0x400, scoped, tag = 'output window, operand 1, single buffered']
    #allocation14 [shape = 's32[1]{0}', space=sflag, size = 0x4, scoped, tag = 'scoped memory for tpu_custom_call.1']
    #allocation15 [shape = 'u8[512]{0}', space=vmem, size = 0x400, scoped, tag = 'output window, operand 2, single buffered']
    %25 = vsyncpa [#allocation5], 0
    %26 = vsyncpa [#allocation8], 0
    %27 = vsyncpa [#allocation11], 0
    %28 = vsyncpa [#allocation6], 0
    %29 = vsyncpa [#allocation14], 0
    // Predicated region
    $region2: #{tpu_custom_call.1} parent=1 // pred_check
      _
    $region3: #{tpu_custom_call.1} parent=1 // pred_check_branch
      %31 = sbr.rel (0) target = $region5
    $region4: #{tpu_custom_call.1} parent=1 // pred_region
      %s32 = sld [smem:[#allocation3]]
      %p33 = scmp.lt.s32.totalorder %s32, 63
      %s34 = scalar_select %p33, %s32, 63
      %s35 = scalar_lea.vmem %s1, %s34
      %s36 = sld [smem:[#allocation3]]
    $region5: #{tpu_custom_call.1} parent=1 // pred_fallthru
      _
    // Predicated region
    $region6: #{tpu_custom_call.1} parent=1 // pred_check
      _
    $region7: #{tpu_custom_call.1} parent=1 // pred_check_branch
      %38 = sbr.rel (0) target = $region9
    $region8: #{tpu_custom_call.1} parent=1 // pred_region
      _
    $region9: #{tpu_custom_call.1} parent=1 // pred_fallthru
      _
    // Predicated region
    $region10: #{tpu_custom_call.1} parent=1 // pred_check
      _
    $region11: #{tpu_custom_call.1} parent=1 // pred_check_branch
      %40 = sbr.rel (0) target = $region13
    $region12: #{tpu_custom_call.1} parent=1 // pred_region
      _
    $region13: #{tpu_custom_call.1} parent=1 // pred_fallthru
      _
    // Predicated region
    $region14: #{tpu_custom_call.1} parent=1 // pred_check
      _
    $region15: #{tpu_custom_call.1} parent=1 // pred_check_branch
      %42 = sbr.rel (0) target = $region17
    $region16: #{tpu_custom_call.1} parent=1 // pred_region
      _
    $region17: #{tpu_custom_call.1} parent=1 // pred_fallthru
      _
    // Predicated region
    $region18: #{tpu_custom_call.1} parent=1 // pred_check
      _
    $region19: #{tpu_custom_call.1} parent=1 // pred_check_branch
      %44 = sbr.rel (0) target = $region21
    $region20: #{tpu_custom_call.1} parent=1 // pred_region
      %s46 = ssub.s32 896, 896
      %47 = vsyncadd [#allocation5], %s46
      %s48 = sshll.u32 [#allocation4], 4
      %s49 = int_to_ptr.vmem [resolvable:$true] %s48
      %54 = dma.hbm_to_vmem [thread:$0]  %s5, 896, %s49, [#allocation5], 128, 128, 8
    $region21: #{tpu_custom_call.1} parent=1 // pred_fallthru
      _
    // Predicated region
    $region22: #{tpu_custom_call.1} parent=1 // pred_check
      _
    $region23: #{tpu_custom_call.1} parent=1 // pred_check_branch
      %56 = sbr.rel (0) target = $region25
    $region24: #{tpu_custom_call.1} parent=1 // pred_region
      %s58 = ssub.s32 4096, 4096
      %59 = vsyncadd [#allocation8], %s58
      %s60 = sshll.u32 [#allocation7], 4
      %s61 = int_to_ptr.vmem [resolvable:$true] %s60
      %66 = dma.hbm_to_vmem [thread:$0]  %s6, 4096, %s61, [#allocation8], 128, 128, 8
    $region25: #{tpu_custom_call.1} parent=1 // pred_fallthru
      _
    // Predicated region
    $region26: #{tpu_custom_call.1} parent=1 // pred_check
      _
    $region27: #{tpu_custom_call.1} parent=1 // pred_check_branch
      %68 = sbr.rel (0) target = $region29
    $region28: #{tpu_custom_call.1} parent=1 // pred_region
      _
    $region29: #{tpu_custom_call.1} parent=1 // pred_fallthru
      _
    // Predicated region
    $region30: #{tpu_custom_call.1} parent=1 // pred_check
      _
    $region31: #{tpu_custom_call.1} parent=1 // pred_check_branch
      %70 = sbr.rel (0) target = $region33
    $region32: #{tpu_custom_call.1} parent=1 // pred_region
      %s72 = ssub.s32 6144, 6144
      %73 = vsyncadd [#allocation8], %s72
      %s74 = sshll.u32 [#allocation9], 4
      %s75 = int_to_ptr.vmem [resolvable:$true] %s74
      %80 = dma.hbm_to_vmem [thread:$0]  %s8, 6144, %s75, [#allocation8], 384, 384, 24
    $region33: #{tpu_custom_call.1} parent=1 // pred_fallthru
      _
    // Predicated region
    $region34: #{tpu_custom_call.1} parent=1 // pred_check
      _
    $region35: #{tpu_custom_call.1} parent=1 // pred_check_branch
      %82 = sbr.rel (0) target = $region37
    $region36: #{tpu_custom_call.1} parent=1 // pred_region
      %s84 = ssub.s32 6144, 6144
      %85 = vsyncadd [#allocation11], %s84
      %s86 = sshll.u32 [#allocation10], 4
      %s87 = int_to_ptr.vmem [resolvable:$true] %s86
      %92 = dma.hbm_to_vmem [thread:$0]  %s9, 6144, %s87, [#allocation11], 384, 384, 24
    $region37: #{tpu_custom_call.1} parent=1 // pred_fallthru
      _
    // Predicated region
    $region38: #{tpu_custom_call.1} parent=1 // pred_check
      _
    $region39: #{tpu_custom_call.1} parent=1 // pred_check_branch
      %94 = sbr.rel (0) target = $region41
    $region40: #{tpu_custom_call.1} parent=1 // pred_region
      _
    $region41: #{tpu_custom_call.1} parent=1 // pred_fallthru
      _
    // Predicated region
    $region42: #{tpu_custom_call.1} parent=1 // pred_check
      _
    $region43: #{tpu_custom_call.1} parent=1 // pred_check_branch
      %96 = sbr.rel (0) target = $region45
    $region44: #{tpu_custom_call.1} parent=1 // pred_region
      _
    $region45: #{tpu_custom_call.1} parent=1 // pred_fallthru
      _
    // Predicated region
    $region46: #{tpu_custom_call.1} parent=1 // pred_check
      _
    $region47: #{tpu_custom_call.1} parent=1 // pred_check_branch
      %98 = sbr.rel (0) target = $region49
    $region48: #{tpu_custom_call.1} parent=1 // pred_region
      _
    $region49: #{tpu_custom_call.1} parent=1 // pred_fallthru
      _
    // Predicated region
    $region50: #{tpu_custom_call.1} parent=1 // pred_check
      _
    $region51: #{tpu_custom_call.1} parent=1 // pred_check_branch
      %100 = sbr.rel (0) target = $region53
    $region52: #{tpu_custom_call.1} parent=1 // pred_region
      _
    $region53: #{tpu_custom_call.1} parent=1 // pred_fallthru
      _
    // Predicated region
    $region54: #{tpu_custom_call.1} parent=1 // pred_check
      _
    $region55: #{tpu_custom_call.1} parent=1 // pred_check_branch
      %102 = sbr.rel (0) target = $region57
    $region56: #{tpu_custom_call.1} parent=1 // pred_region
      _
    $region57: #{tpu_custom_call.1} parent=1 // pred_fallthru
      _
    // Predicated region
    $region58: #{tpu_custom_call.1} parent=1 // pred_check
      _
    $region59: #{tpu_custom_call.1} parent=1 // pred_check_branch
      %104 = sbr.rel (0) target = $region61
    $region60: #{tpu_custom_call.1} parent=1 // pred_region
      _
    $region61: #{tpu_custom_call.1} parent=1 // pred_fallthru
      _
    // Predicated region
    $region62: #{tpu_custom_call.1} parent=1 // pred_check
      _
    $region63: #{tpu_custom_call.1} parent=1 // pred_check_branch
      %106 = sbr.rel (0) target = $region65
    $region64: #{tpu_custom_call.1} parent=1 // pred_region
      %107 = dma.done [#allocation5], 896
    $region65: #{tpu_custom_call.1} parent=1 // pred_fallthru
      _
    // Predicated region
    $region66: #{tpu_custom_call.1} parent=1 // pred_check
      _
    $region67: #{tpu_custom_call.1} parent=1 // pred_check_branch
      %109 = sbr.rel (0) target = $region69
    $region68: #{tpu_custom_call.1} parent=1 // pred_region
      %110 = dma.done [#allocation8], 4096
    $region69: #{tpu_custom_call.1} parent=1 // pred_fallthru
      _
    // Predicated region
    $region70: #{tpu_custom_call.1} parent=1 // pred_check
      _
    $region71: #{tpu_custom_call.1} parent=1 // pred_check_branch
      %112 = sbr.rel (0) target = $region73
    $region72: #{tpu_custom_call.1} parent=1 // pred_region
      %113 = dma.done [#allocation8], 6144
    $region73: #{tpu_custom_call.1} parent=1 // pred_fallthru
      _
    // Predicated region
    $region74: #{tpu_custom_call.1} parent=1 // pred_check
      _
    $region75: #{tpu_custom_call.1} parent=1 // pred_check_branch
      %115 = sbr.rel (0) target = $region77
    $region76: #{tpu_custom_call.1} parent=1 // pred_region
      %116 = dma.done [#allocation11], 6144
    $region77: #{tpu_custom_call.1} parent=1 // pred_fallthru
      _
    %s117 = sld [smem:[#allocation3]]
    %p118 = scmp.lt.s32.totalorder %s117, 63
    %s119 = scalar_select %p118, %s117, 63
    %s120 = scalar_lea.vmem %s1, %s119
    %s121 = sld [smem:[#allocation3]]
    %p122 = scmp.lt.s32.totalorder %s121, 63
    %s123 = scalar_select %p122, %s121, 63
    %s124 = scalar_lea.vmem %s1, %s123
    %s125 = sld [smem:[#allocation3]]
    %v126 = vld [vmem:[%s124] sm:$0x1]
    %v127 = vld [vmem:[%s2] sm:$0x1]
    %v128 = vld [vmem:[%s3] sm:$0xff]
    %v129 = vld [vmem:[%s3 + $0x8] sm:$0xff]
    %v130 = vld [vmem:[%s3 + $0x10] sm:$0xff]
    %v131 = vld [vmem:[%s3 + $0x18] sm:$0xff]
    %v132 = vld [vmem:[%s3 + $0x20] sm:$0xff]
    %v133 = vld [vmem:[%s3 + $0x28] sm:$0xff]
    %v134 = vld [vmem:[%s3 + $0x30] sm:$0xff]
    %v135 = vld [vmem:[%s3 + $0x38] sm:$0xff]
    %v136 = vld [vmem:[%s3 + $0x40] sm:$0xff]
    %v137 = vld [vmem:[%s3 + $0x48] sm:$0xff]
    %v138 = vld [vmem:[%s3 + $0x50] sm:$0xff]
    %v139 = vld [vmem:[%s3 + $0x58] sm:$0xff]
    %v140 = vld [vmem:[%s3 + $0x60] sm:$0xff]
    %v141 = vld [vmem:[%s3 + $0x68] sm:$0xff]
    %v142 = vld [vmem:[%s3 + $0x70] sm:$0xff]
    %v143 = vld [vmem:[%s3 + $0x78] sm:$0xff]
    %v144 = vld [vmem:[%s3 + $0x80] sm:$0xff]
    %v145 = vld [vmem:[%s3 + $0x88] sm:$0xff]
    %v146 = vld [vmem:[%s3 + $0x90] sm:$0xff]
    %v147 = vld [vmem:[%s3 + $0x98] sm:$0xff]
    %v148 = vld [vmem:[%s3 + $0xa0] sm:$0xff]
    %v149 = vld [vmem:[%s3 + $0xa8] sm:$0xff]
    %v150 = vld [vmem:[%s3 + $0xb0] sm:$0xff]
    %v151 = vld [vmem:[%s3 + $0xb8] sm:$0xff]
    %v152 = vld [vmem:[%s3 + $0xc0] sm:$0xff]
    %v153 = vld [vmem:[%s3 + $0xc8] sm:$0xff]
    %v154 = vld [vmem:[%s3 + $0xd0] sm:$0xff]
    %v155 = vld [vmem:[%s3 + $0xd8] sm:$0xff]
    %v156 = vld [vmem:[%s3 + $0xe0] sm:$0xff]
    %v157 = vld [vmem:[%s3 + $0xe8] sm:$0xff]
    %v158 = vld [vmem:[%s3 + $0xf0] sm:$0xff]
    %v159 = vld [vmem:[%s3 + $0xf8] sm:$0xff]
    %v160 = vld [vmem:[%s4] sm:$0x1]
    %161 = vmatprep.subr.mxu0 0.0
    %162 = vmatpush1.msra.mxu0 %v128
    %163 = vmatprep.subr.mxu0 0.0
    %164 = vmatpush1.msra.mxu0 %v129
    %165 = vmatprep.subr.mxu0 0.0
    %166 = vmatpush1.msra.mxu0 %v130
    %167 = vmatprep.subr.mxu0 0.0
    %168 = vmatpush1.msra.mxu0 %v131
    %169 = vmatprep.subr.mxu0 0.0
    %170 = vmatpush1.msra.mxu0 %v132
    %171 = vmatprep.subr.mxu0 0.0
    %172 = vmatpush1.msra.mxu0 %v133
    %173 = vmatprep.subr.mxu0 0.0
    %174 = vmatpush1.msra.mxu0 %v134
    %175 = vmatprep.subr.mxu0 0.0
    %176 = vmatpush1.msra.mxu0 %v135
    %177 = vmatprep.subr.mxu0 0.0
    %178 = vmatpush1.msra.mxu0 %v136
    %179 = vmatprep.subr.mxu0 0.0
    %180 = vmatpush1.msra.mxu0 %v137
    %181 = vmatprep.subr.mxu0 0.0
    %182 = vmatpush1.msra.mxu0 %v138
    %183 = vmatprep.subr.mxu0 0.0
    %184 = vmatpush1.msra.mxu0 %v139
    %185 = vmatprep.subr.mxu0 0.0
    %186 = vmatpush1.msra.mxu0 %v140
    %187 = vmatprep.subr.mxu0 0.0
    %188 = vmatpush1.msra.mxu0 %v141
    %189 = vmatprep.subr.mxu0 0.0
    %190 = vmatpush1.msra.mxu0 %v142
    %191 = vmatprep.subr.mxu0 0.0
    %192 = vmatpush1.msra.mxu0 %v143
    %193 = vmatprep.subr.mxu0 0.0
    %194 = vmatpush1.msra.mxu0 %v144
    %195 = vmatprep.subr.mxu0 0.0
    %196 = vmatpush1.msra.mxu0 %v145
    %197 = vmatprep.subr.mxu0 0.0
    %198 = vmatpush1.msra.mxu0 %v146
    %199 = vmatprep.subr.mxu0 0.0
    %200 = vmatpush1.msra.mxu0 %v147
    %201 = vmatprep.subr.mxu0 0.0
    %202 = vmatpush1.msra.mxu0 %v148
    %203 = vmatprep.subr.mxu0 0.0
    %204 = vmatpush1.msra.mxu0 %v149
    %205 = vmatprep.subr.mxu0 0.0
    %206 = vmatpush1.msra.mxu0 %v150
    %207 = vmatprep.subr.mxu0 0.0
    %208 = vmatpush1.msra.mxu0 %v151
    %209 = vmatprep.subr.mxu0 0.0
    %210 = vmatpush1.msra.mxu0 %v152
    %211 = vmatprep.subr.mxu0 0.0
    %212 = vmatpush1.msra.mxu0 %v153
    %213 = vmatprep.subr.mxu0 0.0
    %214 = vmatpush1.msra.mxu0 %v154
    %215 = vmatprep.subr.mxu0 0.0
    %216 = vmatpush1.msra.mxu0 %v155
    %217 = vmatprep.subr.mxu0 0.0
    %218 = vmatpush1.msra.mxu0 %v156
    %219 = vmatprep.subr.mxu0 0.0
    %220 = vmatpush1.msra.mxu0 %v157
    %221 = vmatprep.subr.mxu0 0.0
    %222 = vmatpush1.msra.mxu0 %v158
    %223 = vmatprep.subr.mxu0 0.0
    %224 = vmatpush1.msra.mxu0 %v159
    %225 = vmatprep.mubr.f32.mxu0 %v127
    %226 = vmatmul.mubr.f32.gmra.mrb[0].mxu0 %v126
    %v227 = vpop.f32.mrb[0].mxu0
    %v228 = vadd.f32 %v160, %v227
    %v229 = vpop.f32.mrb[0].mxu0
    %230 = vdwg.mxu0
    %vm231 = vcmask 401408
    %v232 = vsel %vm231, %v228, -inf
    %233 = vmax.xlane.f32.xlu0 %v232
    %v234 = vpop.xlane.xlu0 %233
    %v235 = vsub.f32 %v228, %v234
    %v236 = vmul.f32 %v235, 1.442695
    %v237 = vpow.pop %v236
    %v238 = vsel %vm231, %v237, 0.0
    %239 = vadd.xlane.f32.xlu0 %v238
    %v240 = vpop.xlane.xlu0 %239
    %v241 = vrcp.pop %v240
    %v242 = vmul.f32 %v237, %v241
    %v243 = vld [vmem:[#allocation4] sm:$0xff]
    %v244 = vld [vmem:[#allocation4 + $0x8] sm:$0xff]
    %v245 = vld [vmem:[#allocation4 + $0x10] sm:$0xff]
    %v246 = vld [vmem:[#allocation4 + $0x18] sm:$0xff]
    %v247 = vld [vmem:[#allocation4 + $0x20] sm:$0xff]
    %v248 = vld [vmem:[#allocation4 + $0x28] sm:$0xff]
    %v249 = vld [vmem:[#allocation4 + $0x30] sm:$0x3]
    %vm250 = vcmask 408576
    %v252 = vsel %vm250, %v242, 0
    %vm254 = vcmask 1041408
    %v256 = vsel %vm254, %v249, 0
    %258 = vmatprep.subr.mxu0 0.0
    %259 = vmatpush1.msra.mxu0 %v243
    %260 = vmatprep.subr.mxu0 0.0
    %261 = vmatpush1.msra.mxu0 %v244
    %262 = vmatprep.subr.mxu0 0.0
    %263 = vmatpush1.msra.mxu0 %v245
    %264 = vmatprep.subr.mxu0 0.0
    %265 = vmatpush1.msra.mxu0 %v246
    %266 = vmatprep.subr.mxu0 0.0
    %267 = vmatpush1.msra.mxu0 %v247
    %268 = vmatprep.subr.mxu0 0.0
    %269 = vmatpush1.msra.mxu0 %v248
    %270 = vmatprep.subr.mxu0 0.0
    %271 = vmatpush1.msra.mxu0 %v256
    %272 = vmatprep.subr.mxu0 0.0
    %273 = vmatpush1.msra.mxu0 0.0
    %274 = vmatprep.subr.mxu0 0.0
    %275 = vmatpush1.msra.mxu0 0.0
    %276 = vmatprep.subr.mxu0 0.0
    %277 = vmatpush1.msra.mxu0 0.0
    %278 = vmatprep.subr.mxu0 0.0
    %279 = vmatpush1.msra.mxu0 0.0
    %280 = vmatprep.subr.mxu0 0.0
    %281 = vmatpush1.msra.mxu0 0.0
    %282 = vmatprep.subr.mxu0 0.0
    %283 = vmatpush1.msra.mxu0 0.0
    %284 = vmatprep.subr.mxu0 0.0
    %285 = vmatpush1.msra.mxu0 0.0
    %286 = vmatprep.subr.mxu0 0.0
    %287 = vmatpush1.msra.mxu0 0.0
    %288 = vmatprep.subr.mxu0 0.0
    %289 = vmatpush1.msra.mxu0 0.0
    %290 = vmatprep.subr.mxu0 0.0
    %291 = vmatpush1.msra.mxu0 0.0
    %292 = vmatprep.subr.mxu0 0.0
    %293 = vmatpush1.msra.mxu0 0.0
    %294 = vmatprep.subr.mxu0 0.0
    %295 = vmatpush1.msra.mxu0 0.0
    %296 = vmatprep.subr.mxu0 0.0
    %297 = vmatpush1.msra.mxu0 0.0
    %298 = vmatprep.subr.mxu0 0.0
    %299 = vmatpush1.msra.mxu0 0.0
    %300 = vmatprep.subr.mxu0 0.0
    %301 = vmatpush1.msra.mxu0 0.0
    %302 = vmatprep.subr.mxu0 0.0
    %303 = vmatpush1.msra.mxu0 0.0
    %304 = vmatprep.subr.mxu0 0.0
    %305 = vmatpush1.msra.mxu0 0.0
    %306 = vmatprep.subr.mxu0 0.0
    %307 = vmatpush1.msra.mxu0 0.0
    %308 = vmatprep.subr.mxu0 0.0
    %309 = vmatpush1.msra.mxu0 0.0
    %310 = vmatprep.subr.mxu0 0.0
    %311 = vmatpush1.msra.mxu0 0.0
    %312 = vmatprep.subr.mxu0 0.0
    %313 = vmatpush1.msra.mxu0 0.0
    %314 = vmatprep.subr.mxu0 0.0
    %315 = vmatpush1.msra.mxu0 0.0
    %316 = vmatprep.subr.mxu0 0.0
    %317 = vmatpush1.msra.mxu0 0.0
    %318 = vmatprep.subr.mxu0 0.0
    %319 = vmatpush1.msra.mxu0 0.0
    %320 = vmatprep.subr.mxu0 0.0
    %321 = vmatpush1.msra.mxu0 0.0
    %322 = vmatprep.mubr.f32.mxu0 0.0
    %323 = vmatmul.mubr.f32.gmra.mrb[0].mxu0 %v252
    %v324 = vpop.f32.mrb[0].mxu0
    %v325 = vadd.f32 0.0, %v324
    %v326 = vpop.f32.mrb[0].mxu0
    %327 = vdwg.mxu0
    %v328 = vld [vmem:[#allocation7] sm:$0xff]
    %v329 = vld [vmem:[#allocation7 + $0x8] sm:$0xff]
    %v330 = vld [vmem:[#allocation7 + $0x10] sm:$0xff]
    %v331 = vld [vmem:[#allocation7 + $0x18] sm:$0xff]
    %v332 = vld [vmem:[#allocation7 + $0x20] sm:$0xff]
    %v333 = vld [vmem:[#allocation7 + $0x28] sm:$0xff]
    %v334 = vld [vmem:[#allocation7 + $0x30] sm:$0xff]
    %v335 = vld [vmem:[#allocation7 + $0x38] sm:$0xff]
    %v336 = vld [vmem:[#allocation7 + $0x40] sm:$0xff]
    %v337 = vld [vmem:[#allocation7 + $0x48] sm:$0xff]
    %v338 = vld [vmem:[#allocation7 + $0x50] sm:$0xff]
    %v339 = vld [vmem:[#allocation7 + $0x58] sm:$0xff]
    %v340 = vld [vmem:[#allocation7 + $0x60] sm:$0xff]
    %v341 = vld [vmem:[#allocation7 + $0x68] sm:$0xff]
    %v342 = vld [vmem:[#allocation7 + $0x70] sm:$0xff]
    %v343 = vld [vmem:[#allocation7 + $0x78] sm:$0xff]
    %v344 = vld [vmem:[#allocation7 + $0x80] sm:$0xff]
    %v345 = vld [vmem:[#allocation7 + $0x88] sm:$0xff]
    %v346 = vld [vmem:[#allocation7 + $0x90] sm:$0xff]
    %v347 = vld [vmem:[#allocation7 + $0x98] sm:$0xff]
    %v348 = vld [vmem:[#allocation7 + $0xa0] sm:$0xff]
    %v349 = vld [vmem:[#allocation7 + $0xa8] sm:$0xff]
    %v350 = vld [vmem:[#allocation7 + $0xb0] sm:$0xff]
    %v351 = vld [vmem:[#allocation7 + $0xb8] sm:$0xff]
    %v352 = vld [vmem:[#allocation7 + $0xc0] sm:$0xff]
    %v353 = vld [vmem:[#allocation7 + $0xc8] sm:$0xff]
    %v354 = vld [vmem:[#allocation7 + $0xd0] sm:$0xff]
    %v355 = vld [vmem:[#allocation7 + $0xd8] sm:$0xff]
    %v356 = vld [vmem:[#allocation7 + $0xe0] sm:$0xff]
    %v357 = vld [vmem:[#allocation7 + $0xe8] sm:$0xff]
    %v358 = vld [vmem:[#allocation7 + $0xf0] sm:$0xff]
    %v359 = vld [vmem:[#allocation7 + $0xf8] sm:$0xff]
    %v360 = vld [vmem:[%s7] sm:$0x1]
    %361 = vmatprep.subr.mxu0 0.0
    %362 = vmatpush1.msra.mxu0 %v328
    %363 = vmatprep.subr.mxu0 0.0
    %364 = vmatpush1.msra.mxu0 %v329
    %365 = vmatprep.subr.mxu0 0.0
    %366 = vmatpush1.msra.mxu0 %v330
    %367 = vmatprep.subr.mxu0 0.0
    %368 = vmatpush1.msra.mxu0 %v331
    %369 = vmatprep.subr.mxu0 0.0
    %370 = vmatpush1.msra.mxu0 %v332
    %371 = vmatprep.subr.mxu0 0.0
    %372 = vmatpush1.msra.mxu0 %v333
    %373 = vmatprep.subr.mxu0 0.0
    %374 = vmatpush1.msra.mxu0 %v334
    %375 = vmatprep.subr.mxu0 0.0
    %376 = vmatpush1.msra.mxu0 %v335
    %377 = vmatprep.subr.mxu0 0.0
    %378 = vmatpush1.msra.mxu0 %v336
    %379 = vmatprep.subr.mxu0 0.0
    %380 = vmatpush1.msra.mxu0 %v337
    %381 = vmatprep.subr.mxu0 0.0
    %382 = vmatpush1.msra.mxu0 %v338
    %383 = vmatprep.subr.mxu0 0.0
    %384 = vmatpush1.msra.mxu0 %v339
    %385 = vmatprep.subr.mxu0 0.0
    %386 = vmatpush1.msra.mxu0 %v340
    %387 = vmatprep.subr.mxu0 0.0
    %388 = vmatpush1.msra.mxu0 %v341
    %389 = vmatprep.subr.mxu0 0.0
    %390 = vmatpush1.msra.mxu0 %v342
    %391 = vmatprep.subr.mxu0 0.0
    %392 = vmatpush1.msra.mxu0 %v343
    %393 = vmatprep.subr.mxu0 0.0
    %394 = vmatpush1.msra.mxu0 %v344
    %395 = vmatprep.subr.mxu0 0.0
    %396 = vmatpush1.msra.mxu0 %v345
    %397 = vmatprep.subr.mxu0 0.0
    %398 = vmatpush1.msra.mxu0 %v346
    %399 = vmatprep.subr.mxu0 0.0
    %400 = vmatpush1.msra.mxu0 %v347
    %401 = vmatprep.subr.mxu0 0.0
    %402 = vmatpush1.msra.mxu0 %v348
    %403 = vmatprep.subr.mxu0 0.0
    %404 = vmatpush1.msra.mxu0 %v349
    %405 = vmatprep.subr.mxu0 0.0
    %406 = vmatpush1.msra.mxu0 %v350
    %407 = vmatprep.subr.mxu0 0.0
    %408 = vmatpush1.msra.mxu0 %v351
    %409 = vmatprep.subr.mxu0 0.0
    %410 = vmatpush1.msra.mxu0 %v352
    %411 = vmatprep.subr.mxu0 0.0
    %412 = vmatpush1.msra.mxu0 %v353
    %413 = vmatprep.subr.mxu0 0.0
    %414 = vmatpush1.msra.mxu0 %v354
    %415 = vmatprep.subr.mxu0 0.0
    %416 = vmatpush1.msra.mxu0 %v355
    %417 = vmatprep.subr.mxu0 0.0
    %418 = vmatpush1.msra.mxu0 %v356
    %419 = vmatprep.subr.mxu0 0.0
    %420 = vmatpush1.msra.mxu0 %v357
    %421 = vmatprep.subr.mxu0 0.0
    %422 = vmatpush1.msra.mxu0 %v358
    %423 = vmatprep.subr.mxu0 0.0
    %424 = vmatpush1.msra.mxu0 %v359
    %425 = vmatprep.mubr.f32.mxu0 %v325
    %426 = vmatmul.mubr.f32.gmra.mrb[0].mxu0 %v126
    %v427 = vpop.f32.mrb[0].mxu0
    %v428 = vadd.f32 %v360, %v427
    %v429 = vpop.f32.mrb[0].mxu0
    %430 = vdwg.mxu0
    %v431 = vmax.f32 %v428, 0.0
    %v432 = vld [vmem:[#allocation9] sm:$0xff]
    %v433 = vld [vmem:[#allocation9 + $0x8] sm:$0xff]
    %v434 = vld [vmem:[#allocation9 + $0x10] sm:$0xff]
    %v435 = vld [vmem:[#allocation9 + $0x18] sm:$0xff]
    %v436 = vld [vmem:[#allocation9 + $0x20] sm:$0xff]
    %v437 = vld [vmem:[#allocation9 + $0x28] sm:$0xff]
    %v438 = vld [vmem:[#allocation9 + $0x30] sm:$0xff]
    %v439 = vld [vmem:[#allocation9 + $0x38] sm:$0xff]
    %v440 = vld [vmem:[#allocation9 + $0x40] sm:$0xff]
    %v441 = vld [vmem:[#allocation9 + $0x48] sm:$0xff]
    %v442 = vld [vmem:[#allocation9 + $0x50] sm:$0xff]
    %v443 = vld [vmem:[#allocation9 + $0x58] sm:$0xff]
    %v444 = vld [vmem:[#allocation9 + $0x60] sm:$0xff]
    %v445 = vld [vmem:[#allocation9 + $0x68] sm:$0xff]
    %v446 = vld [vmem:[#allocation9 + $0x70] sm:$0xff]
    %v447 = vld [vmem:[#allocation9 + $0x78] sm:$0xff]
    %v448 = vld [vmem:[#allocation9 + $0x80] sm:$0xff]
    %v449 = vld [vmem:[#allocation9 + $0x88] sm:$0xff]
    %v450 = vld [vmem:[#allocation9 + $0x90] sm:$0xff]
    %v451 = vld [vmem:[#allocation9 + $0x98] sm:$0xff]
    %v452 = vld [vmem:[#allocation9 + $0xa0] sm:$0xff]
    %v453 = vld [vmem:[#allocation9 + $0xa8] sm:$0xff]
    %v454 = vld [vmem:[#allocation9 + $0xb0] sm:$0xff]
    %v455 = vld [vmem:[#allocation9 + $0xb8] sm:$0xff]
    %v456 = vld [vmem:[#allocation9 + $0xc0] sm:$0xff]
    %v457 = vld [vmem:[#allocation9 + $0xc8] sm:$0xff]
    %v458 = vld [vmem:[#allocation9 + $0xd0] sm:$0xff]
    %v459 = vld [vmem:[#allocation9 + $0xd8] sm:$0xff]
    %v460 = vld [vmem:[#allocation9 + $0xe0] sm:$0xff]
    %v461 = vld [vmem:[#allocation9 + $0xe8] sm:$0xff]
    %v462 = vld [vmem:[#allocation9 + $0xf0] sm:$0xff]
    %v463 = vld [vmem:[#allocation9 + $0xf8] sm:$0xff]
    %v464 = vld [vmem:[#allocation9 + $0x100] sm:$0xff]
    %v465 = vld [vmem:[#allocation9 + $0x108] sm:$0xff]
    %v466 = vld [vmem:[#allocation9 + $0x110] sm:$0xff]
    %v467 = vld [vmem:[#allocation9 + $0x118] sm:$0xff]
    %v468 = vld [vmem:[#allocation9 + $0x120] sm:$0xff]
    %v469 = vld [vmem:[#allocation9 + $0x128] sm:$0xff]
    %v470 = vld [vmem:[#allocation9 + $0x130] sm:$0xff]
    %v471 = vld [vmem:[#allocation9 + $0x138] sm:$0xff]
    %v472 = vld [vmem:[#allocation9 + $0x140] sm:$0xff]
    %v473 = vld [vmem:[#allocation9 + $0x148] sm:$0xff]
    %v474 = vld [vmem:[#allocation9 + $0x150] sm:$0xff]
    %v475 = vld [vmem:[#allocation9 + $0x158] sm:$0xff]
    %v476 = vld [vmem:[#allocation9 + $0x160] sm:$0xff]
    %v477 = vld [vmem:[#allocation9 + $0x168] sm:$0xff]
    %v478 = vld [vmem:[#allocation9 + $0x170] sm:$0xff]
    %v479 = vld [vmem:[#allocation9 + $0x178] sm:$0xff]
    %v480 = vld [vmem:[%s10] sm:$0x7]
    %v482 = vlaneseq
    %v483 = vshrl.u32 %v482, 7
    %v484 = vsub.s32 0, %v483
    %v485 = vrot.slane %v480, %v484
    %v486 = vlaneseq
    %v487 = vshrl.u32 %v486, 7
    %v488 = vsub.s32 1, %v487
    %v489 = vrot.slane %v480, %v488
    %v490 = vlaneseq
    %v491 = vshrl.u32 %v490, 7
    %v492 = vsub.s32 2, %v491
    %v493 = vrot.slane %v480, %v492
    %497 = vmatprep.subr.mxu0 %v433
    %498 = vmatpush1.msra.mxu0 %v432
    %499 = vmatprep.subr.mxu0 %v436
    %500 = vmatpush1.msra.mxu0 %v435
    %501 = vmatprep.subr.mxu0 %v439
    %502 = vmatpush1.msra.mxu0 %v438
    %503 = vmatprep.subr.mxu0 %v442
    %504 = vmatpush1.msra.mxu0 %v441
    %505 = vmatprep.subr.mxu0 %v445
    %506 = vmatpush1.msra.mxu0 %v444
    %507 = vmatprep.subr.mxu0 %v448
    %508 = vmatpush1.msra.mxu0 %v447
    %509 = vmatprep.subr.mxu0 %v451
    %510 = vmatpush1.msra.mxu0 %v450
    %511 = vmatprep.subr.mxu0 %v454
    %512 = vmatpush1.msra.mxu0 %v453
    %513 = vmatprep.subr.mxu0 %v457
    %514 = vmatpush1.msra.mxu0 %v456
    %515 = vmatprep.subr.mxu0 %v460
    %516 = vmatpush1.msra.mxu0 %v459
    %517 = vmatprep.subr.mxu0 %v463
    %518 = vmatpush1.msra.mxu0 %v462
    %519 = vmatprep.subr.mxu0 %v466
    %520 = vmatpush1.msra.mxu0 %v465
    %521 = vmatprep.subr.mxu0 %v469
    %522 = vmatpush1.msra.mxu0 %v468
    %523 = vmatprep.subr.mxu0 %v472
    %524 = vmatpush1.msra.mxu0 %v471
    %525 = vmatprep.subr.mxu0 %v475
    %526 = vmatpush1.msra.mxu0 %v474
    %527 = vmatprep.subr.mxu0 %v478
    %528 = vmatpush1.msra.mxu0 %v477
    %529 = vmatprep.subr.mxu0 0.0
    %530 = vmatpush1.msra.mxu0 0.0
    %531 = vmatprep.subr.mxu0 0.0
    %532 = vmatpush1.msra.mxu0 0.0
    %533 = vmatprep.subr.mxu0 0.0
    %534 = vmatpush1.msra.mxu0 0.0
    %535 = vmatprep.subr.mxu0 0.0
    %536 = vmatpush1.msra.mxu0 0.0
    %537 = vmatprep.subr.mxu0 0.0
    %538 = vmatpush1.msra.mxu0 0.0
    %539 = vmatprep.subr.mxu0 0.0
    %540 = vmatpush1.msra.mxu0 0.0
    %541 = vmatprep.subr.mxu0 0.0
    %542 = vmatpush1.msra.mxu0 0.0
    %543 = vmatprep.subr.mxu0 0.0
    %544 = vmatpush1.msra.mxu0 0.0
    %545 = vmatprep.subr.mxu0 0.0
    %546 = vmatpush1.msra.mxu0 0.0
    %547 = vmatprep.subr.mxu0 0.0
    %548 = vmatpush1.msra.mxu0 0.0
    %549 = vmatprep.subr.mxu0 0.0
    %550 = vmatpush1.msra.mxu0 0.0
    %551 = vmatprep.subr.mxu0 0.0
    %552 = vmatpush1.msra.mxu0 0.0
    %553 = vmatprep.subr.mxu0 0.0
    %554 = vmatpush1.msra.mxu0 0.0
    %555 = vmatprep.subr.mxu0 0.0
    %556 = vmatpush1.msra.mxu0 0.0
    %557 = vmatprep.subr.mxu0 0.0
    %558 = vmatpush1.msra.mxu0 0.0
    %559 = vmatprep.subr.mxu0 0.0
    %560 = vmatpush1.msra.mxu0 0.0
    %561 = vmatprep.mubr.f32.mxu0 0.0
    %562 = vmatmul.mubr.f32.gmra.mrb[0].mxu0 %v431
    %v563 = vpop.f32.mrb[0].mxu0
    %v564 = vadd.f32 %v485, %v563
    %v565 = vpop.f32.mrb[0].mxu0
    %v566 = vadd.f32 %v489, %v565
    %567 = vdwg.mxu0
    %568 = vmatprep.subr.mxu0 0.0
    %569 = vmatpush1.msra.mxu0 %v434
    %570 = vmatprep.subr.mxu0 0.0
    %571 = vmatpush1.msra.mxu0 %v437
    %572 = vmatprep.subr.mxu0 0.0
    %573 = vmatpush1.msra.mxu0 %v440
    %574 = vmatprep.subr.mxu0 0.0
    %575 = vmatpush1.msra.mxu0 %v443
    %576 = vmatprep.subr.mxu0 0.0
    %577 = vmatpush1.msra.mxu0 %v446
    %578 = vmatprep.subr.mxu0 0.0
    %579 = vmatpush1.msra.mxu0 %v449
    %580 = vmatprep.subr.mxu0 0.0
    %581 = vmatpush1.msra.mxu0 %v452
    %582 = vmatprep.subr.mxu0 0.0
    %583 = vmatpush1.msra.mxu0 %v455
    %584 = vmatprep.subr.mxu0 0.0
    %585 = vmatpush1.msra.mxu0 %v458
    %586 = vmatprep.subr.mxu0 0.0
    %587 = vmatpush1.msra.mxu0 %v461
    %588 = vmatprep.subr.mxu0 0.0
    %589 = vmatpush1.msra.mxu0 %v464
    %590 = vmatprep.subr.mxu0 0.0
    %591 = vmatpush1.msra.mxu0 %v467
    %592 = vmatprep.subr.mxu0 0.0
    %593 = vmatpush1.msra.mxu0 %v470
    %594 = vmatprep.subr.mxu0 0.0
    %595 = vmatpush1.msra.mxu0 %v473
    %596 = vmatprep.subr.mxu0 0.0
    %597 = vmatpush1.msra.mxu0 %v476
    %598 = vmatprep.subr.mxu0 0.0
    %599 = vmatpush1.msra.mxu0 %v479
    %600 = vmatprep.subr.mxu0 0.0
    %601 = vmatpush1.msra.mxu0 0.0
    %602 = vmatprep.subr.mxu0 0.0
    %603 = vmatpush1.msra.mxu0 0.0
    %604 = vmatprep.subr.mxu0 0.0
    %605 = vmatpush1.msra.mxu0 0.0
    %606 = vmatprep.subr.mxu0 0.0
    %607 = vmatpush1.msra.mxu0 0.0
    %608 = vmatprep.subr.mxu0 0.0
    %609 = vmatpush1.msra.mxu0 0.0
    %610 = vmatprep.subr.mxu0 0.0
    %611 = vmatpush1.msra.mxu0 0.0
    %612 = vmatprep.subr.mxu0 0.0
    %613 = vmatpush1.msra.mxu0 0.0
    %614 = vmatprep.subr.mxu0 0.0
    %615 = vmatpush1.msra.mxu0 0.0
    %616 = vmatprep.subr.mxu0 0.0
    %617 = vmatpush1.msra.mxu0 0.0
    %618 = vmatprep.subr.mxu0 0.0
    %619 = vmatpush1.msra.mxu0 0.0
    %620 = vmatprep.subr.mxu0 0.0
    %621 = vmatpush1.msra.mxu0 0.0
    %622 = vmatprep.subr.mxu0 0.0
    %623 = vmatpush1.msra.mxu0 0.0
    %624 = vmatprep.subr.mxu0 0.0
    %625 = vmatpush1.msra.mxu0 0.0
    %626 = vmatprep.subr.mxu0 0.0
    %627 = vmatpush1.msra.mxu0 0.0
    %628 = vmatprep.subr.mxu0 0.0
    %629 = vmatpush1.msra.mxu0 0.0
    %630 = vmatprep.subr.mxu0 0.0
    %631 = vmatpush1.msra.mxu0 0.0
    %632 = vmatprep.mubr.f32.mxu0 0.0
    %633 = vmatmul.mubr.f32.gmra.mrb[0].mxu0 %v431
    %v634 = vpop.f32.mrb[0].mxu0
    %v635 = vadd.f32 %v493, %v634
    %v636 = vpop.f32.mrb[0].mxu0
    %637 = vdwg.mxu0
    %v638 = vld [vmem:[#allocation10] sm:$0xff]
    %v639 = vld [vmem:[#allocation10 + $0x8] sm:$0xff]
    %v640 = vld [vmem:[#allocation10 + $0x10] sm:$0xff]
    %v641 = vld [vmem:[#allocation10 + $0x18] sm:$0xff]
    %v642 = vld [vmem:[#allocation10 + $0x20] sm:$0xff]
    %v643 = vld [vmem:[#allocation10 + $0x28] sm:$0xff]
    %v644 = vld [vmem:[#allocation10 + $0x30] sm:$0xff]
    %v645 = vld [vmem:[#allocation10 + $0x38] sm:$0xff]
    %v646 = vld [vmem:[#allocation10 + $0x40] sm:$0xff]
    %v647 = vld [vmem:[#allocation10 + $0x48] sm:$0xff]
    %v648 = vld [vmem:[#allocation10 + $0x50] sm:$0xff]
    %v649 = vld [vmem:[#allocation10 + $0x58] sm:$0xff]
    %v650 = vld [vmem:[#allocation10 + $0x60] sm:$0xff]
    %v651 = vld [vmem:[#allocation10 + $0x68] sm:$0xff]
    %v652 = vld [vmem:[#allocation10 + $0x70] sm:$0xff]
    %v653 = vld [vmem:[#allocation10 + $0x78] sm:$0xff]
    %v654 = vld [vmem:[#allocation10 + $0x80] sm:$0xff]
    %v655 = vld [vmem:[#allocation10 + $0x88] sm:$0xff]
    %v656 = vld [vmem:[#allocation10 + $0x90] sm:$0xff]
    %v657 = vld [vmem:[#allocation10 + $0x98] sm:$0xff]
    %v658 = vld [vmem:[#allocation10 + $0xa0] sm:$0xff]
    %v659 = vld [vmem:[#allocation10 + $0xa8] sm:$0xff]
    %v660 = vld [vmem:[#allocation10 + $0xb0] sm:$0xff]
    %v661 = vld [vmem:[#allocation10 + $0xb8] sm:$0xff]
    %v662 = vld [vmem:[#allocation10 + $0xc0] sm:$0xff]
    %v663 = vld [vmem:[#allocation10 + $0xc8] sm:$0xff]
    %v664 = vld [vmem:[#allocation10 + $0xd0] sm:$0xff]
    %v665 = vld [vmem:[#allocation10 + $0xd8] sm:$0xff]
    %v666 = vld [vmem:[#allocation10 + $0xe0] sm:$0xff]
    %v667 = vld [vmem:[#allocation10 + $0xe8] sm:$0xff]
    %v668 = vld [vmem:[#allocation10 + $0xf0] sm:$0xff]
    %v669 = vld [vmem:[#allocation10 + $0xf8] sm:$0xff]
    %v670 = vld [vmem:[#allocation10 + $0x100] sm:$0xff]
    %v671 = vld [vmem:[#allocation10 + $0x108] sm:$0xff]
    %v672 = vld [vmem:[#allocation10 + $0x110] sm:$0xff]
    %v673 = vld [vmem:[#allocation10 + $0x118] sm:$0xff]
    %v674 = vld [vmem:[#allocation10 + $0x120] sm:$0xff]
    %v675 = vld [vmem:[#allocation10 + $0x128] sm:$0xff]
    %v676 = vld [vmem:[#allocation10 + $0x130] sm:$0xff]
    %v677 = vld [vmem:[#allocation10 + $0x138] sm:$0xff]
    %v678 = vld [vmem:[#allocation10 + $0x140] sm:$0xff]
    %v679 = vld [vmem:[#allocation10 + $0x148] sm:$0xff]
    %v680 = vld [vmem:[#allocation10 + $0x150] sm:$0xff]
    %v681 = vld [vmem:[#allocation10 + $0x158] sm:$0xff]
    %v682 = vld [vmem:[#allocation10 + $0x160] sm:$0xff]
    %v683 = vld [vmem:[#allocation10 + $0x168] sm:$0xff]
    %v684 = vld [vmem:[#allocation10 + $0x170] sm:$0xff]
    %v685 = vld [vmem:[#allocation10 + $0x178] sm:$0xff]
    %v686 = vld [vmem:[%s11] sm:$0x7]
    %v688 = vlaneseq
    %v689 = vshrl.u32 %v688, 7
    %v690 = vsub.s32 0, %v689
    %v691 = vrot.slane %v686, %v690
    %v692 = vlaneseq
    %v693 = vshrl.u32 %v692, 7
    %v694 = vsub.s32 1, %v693
    %v695 = vrot.slane %v686, %v694
    %v696 = vlaneseq
    %v697 = vshrl.u32 %v696, 7
    %v698 = vsub.s32 2, %v697
    %v699 = vrot.slane %v686, %v698
    %703 = vmatprep.subr.mxu0 %v639
    %704 = vmatpush1.msra.mxu0 %v638
    %705 = vmatprep.subr.mxu0 %v642
    %706 = vmatpush1.msra.mxu0 %v641
    %707 = vmatprep.subr.mxu0 %v645
    %708 = vmatpush1.msra.mxu0 %v644
    %709 = vmatprep.subr.mxu0 %v648
    %710 = vmatpush1.msra.mxu0 %v647
    %711 = vmatprep.subr.mxu0 %v651
    %712 = vmatpush1.msra.mxu0 %v650
    %713 = vmatprep.subr.mxu0 %v654
    %714 = vmatpush1.msra.mxu0 %v653
    %715 = vmatprep.subr.mxu0 %v657
    %716 = vmatpush1.msra.mxu0 %v656
    %717 = vmatprep.subr.mxu0 %v660
    %718 = vmatpush1.msra.mxu0 %v659
    %719 = vmatprep.subr.mxu0 %v663
    %720 = vmatpush1.msra.mxu0 %v662
    %721 = vmatprep.subr.mxu0 %v666
    %722 = vmatpush1.msra.mxu0 %v665
    %723 = vmatprep.subr.mxu0 %v669
    %724 = vmatpush1.msra.mxu0 %v668
    %725 = vmatprep.subr.mxu0 %v672
    %726 = vmatpush1.msra.mxu0 %v671
    %727 = vmatprep.subr.mxu0 %v675
    %728 = vmatpush1.msra.mxu0 %v674
    %729 = vmatprep.subr.mxu0 %v678
    %730 = vmatpush1.msra.mxu0 %v677
    %731 = vmatprep.subr.mxu0 %v681
    %732 = vmatpush1.msra.mxu0 %v680
    %733 = vmatprep.subr.mxu0 %v684
    %734 = vmatpush1.msra.mxu0 %v683
    %735 = vmatprep.subr.mxu0 0.0
    %736 = vmatpush1.msra.mxu0 0.0
    %737 = vmatprep.subr.mxu0 0.0
    %738 = vmatpush1.msra.mxu0 0.0
    %739 = vmatprep.subr.mxu0 0.0
    %740 = vmatpush1.msra.mxu0 0.0
    %741 = vmatprep.subr.mxu0 0.0
    %742 = vmatpush1.msra.mxu0 0.0
    %743 = vmatprep.subr.mxu0 0.0
    %744 = vmatpush1.msra.mxu0 0.0
    %745 = vmatprep.subr.mxu0 0.0
    %746 = vmatpush1.msra.mxu0 0.0
    %747 = vmatprep.subr.mxu0 0.0
    %748 = vmatpush1.msra.mxu0 0.0
    %749 = vmatprep.subr.mxu0 0.0
    %750 = vmatpush1.msra.mxu0 0.0
    %751 = vmatprep.subr.mxu0 0.0
    %752 = vmatpush1.msra.mxu0 0.0
    %753 = vmatprep.subr.mxu0 0.0
    %754 = vmatpush1.msra.mxu0 0.0
    %755 = vmatprep.subr.mxu0 0.0
    %756 = vmatpush1.msra.mxu0 0.0
    %757 = vmatprep.subr.mxu0 0.0
    %758 = vmatpush1.msra.mxu0 0.0
    %759 = vmatprep.subr.mxu0 0.0
    %760 = vmatpush1.msra.mxu0 0.0
    %761 = vmatprep.subr.mxu0 0.0
    %762 = vmatpush1.msra.mxu0 0.0
    %763 = vmatprep.subr.mxu0 0.0
    %764 = vmatpush1.msra.mxu0 0.0
    %765 = vmatprep.subr.mxu0 0.0
    %766 = vmatpush1.msra.mxu0 0.0
    %767 = vmatprep.mubr.f32.mxu0 0.0
    %768 = vmatmul.mubr.f32.gmra.mrb[0].mxu0 %v127
    %v769 = vpop.f32.mrb[0].mxu0
    %v770 = vadd.f32 %v691, %v769
    %v771 = vpop.f32.mrb[0].mxu0
    %v772 = vadd.f32 %v695, %v771
    %773 = vdwg.mxu0
    %774 = vmatprep.subr.mxu0 0.0
    %775 = vmatpush1.msra.mxu0 %v640
    %776 = vmatprep.subr.mxu0 0.0
    %777 = vmatpush1.msra.mxu0 %v643
    %778 = vmatprep.subr.mxu0 0.0
    %779 = vmatpush1.msra.mxu0 %v646
    %780 = vmatprep.subr.mxu0 0.0
    %781 = vmatpush1.msra.mxu0 %v649
    %782 = vmatprep.subr.mxu0 0.0
    %783 = vmatpush1.msra.mxu0 %v652
    %784 = vmatprep.subr.mxu0 0.0
    %785 = vmatpush1.msra.mxu0 %v655
    %786 = vmatprep.subr.mxu0 0.0
    %787 = vmatpush1.msra.mxu0 %v658
    %788 = vmatprep.subr.mxu0 0.0
    %789 = vmatpush1.msra.mxu0 %v661
    %790 = vmatprep.subr.mxu0 0.0
    %791 = vmatpush1.msra.mxu0 %v664
    %792 = vmatprep.subr.mxu0 0.0
    %793 = vmatpush1.msra.mxu0 %v667
    %794 = vmatprep.subr.mxu0 0.0
    %795 = vmatpush1.msra.mxu0 %v670
    %796 = vmatprep.subr.mxu0 0.0
    %797 = vmatpush1.msra.mxu0 %v673
    %798 = vmatprep.subr.mxu0 0.0
    %799 = vmatpush1.msra.mxu0 %v676
    %800 = vmatprep.subr.mxu0 0.0
    %801 = vmatpush1.msra.mxu0 %v679
    %802 = vmatprep.subr.mxu0 0.0
    %803 = vmatpush1.msra.mxu0 %v682
    %804 = vmatprep.subr.mxu0 0.0
    %805 = vmatpush1.msra.mxu0 %v685
    %806 = vmatprep.subr.mxu0 0.0
    %807 = vmatpush1.msra.mxu0 0.0
    %808 = vmatprep.subr.mxu0 0.0
    %809 = vmatpush1.msra.mxu0 0.0
    %810 = vmatprep.subr.mxu0 0.0
    %811 = vmatpush1.msra.mxu0 0.0
    %812 = vmatprep.subr.mxu0 0.0
    %813 = vmatpush1.msra.mxu0 0.0
    %814 = vmatprep.subr.mxu0 0.0
    %815 = vmatpush1.msra.mxu0 0.0
    %816 = vmatprep.subr.mxu0 0.0
    %817 = vmatpush1.msra.mxu0 0.0
    %818 = vmatprep.subr.mxu0 0.0
    %819 = vmatpush1.msra.mxu0 0.0
    %820 = vmatprep.subr.mxu0 0.0
    %821 = vmatpush1.msra.mxu0 0.0
    %822 = vmatprep.subr.mxu0 0.0
    %823 = vmatpush1.msra.mxu0 0.0
    %824 = vmatprep.subr.mxu0 0.0
    %825 = vmatpush1.msra.mxu0 0.0
    %826 = vmatprep.subr.mxu0 0.0
    %827 = vmatpush1.msra.mxu0 0.0
    %828 = vmatprep.subr.mxu0 0.0
    %829 = vmatpush1.msra.mxu0 0.0
    %830 = vmatprep.subr.mxu0 0.0
    %831 = vmatpush1.msra.mxu0 0.0
    %832 = vmatprep.subr.mxu0 0.0
    %833 = vmatpush1.msra.mxu0 0.0
    %834 = vmatprep.subr.mxu0 0.0
    %835 = vmatpush1.msra.mxu0 0.0
    %836 = vmatprep.subr.mxu0 0.0
    %837 = vmatpush1.msra.mxu0 0.0
    %838 = vmatprep.mubr.f32.mxu0 0.0
    %839 = vmatmul.mubr.f32.gmra.mrb[0].mxu0 %v127
    %v840 = vpop.f32.mrb[0].mxu0
    %v841 = vadd.f32 %v699, %v840
    %v842 = vpop.f32.mrb[0].mxu0
    %843 = vdwg.mxu0
    %v844 = vadd.f32 %v564, %v770
    %v845 = vxor.u32 %v844, 2147483648
    %v846 = vmul.f32 %v845, 1.442695
    %v847 = vpow.pop %v846
    %v848 = vadd.f32 %v847, 1.0
    %v849 = vrcp.pop %v848
    %v850 = vmul.f32 1.0, %v849
    %v851 = vadd.f32 %v566, %v772
    %v852 = vxor.u32 %v851, 2147483648
    %v853 = vmul.f32 %v852, 1.442695
    %v854 = vpow.pop %v853
    %v855 = vadd.f32 %v854, 1.0
    %v856 = vrcp.pop %v855
    %v857 = vmul.f32 1.0, %v856
    %v858 = vmul.f32 %v850, %v841
    %v859 = vadd.f32 %v635, %v858
    %v860 = vtanh.pop %v859
    %v861 = vsub.f32 1.0, %v857
    %v862 = vmul.f32 %v861, %v860
    %v863 = vmul.f32 %v857, %v127
    %v864 = vadd.f32 %v862, %v863
    %v865 = vld [vmem:[%s12] sm:$0xff]
    %v866 = vld [vmem:[%s12 + $0x8] sm:$0xff]
    %v867 = vld [vmem:[%s12 + $0x10] sm:$0xff]
    %v868 = vld [vmem:[%s12 + $0x18] sm:$0xff]
    %v869 = vld [vmem:[%s12 + $0x20] sm:$0xff]
    %v870 = vld [vmem:[%s12 + $0x28] sm:$0xff]
    %v871 = vld [vmem:[%s12 + $0x30] sm:$0xff]
    %v872 = vld [vmem:[%s12 + $0x38] sm:$0xff]
    %v873 = vld [vmem:[%s12 + $0x40] sm:$0xff]
    %v874 = vld [vmem:[%s12 + $0x48] sm:$0xff]
    %v875 = vld [vmem:[%s12 + $0x50] sm:$0xff]
    %v876 = vld [vmem:[%s12 + $0x58] sm:$0xff]
    %v877 = vld [vmem:[%s12 + $0x60] sm:$0xff]
    %v878 = vld [vmem:[%s12 + $0x68] sm:$0xff]
    %v879 = vld [vmem:[%s12 + $0x70] sm:$0xff]
    %v880 = vld [vmem:[%s12 + $0x78] sm:$0xff]
    %v881 = vld [vmem:[%s12 + $0x80] sm:$0xff]
    %v882 = vld [vmem:[%s12 + $0x88] sm:$0xff]
    %v883 = vld [vmem:[%s12 + $0x90] sm:$0xff]
    %v884 = vld [vmem:[%s12 + $0x98] sm:$0xff]
    %v885 = vld [vmem:[%s12 + $0xa0] sm:$0xff]
    %v886 = vld [vmem:[%s12 + $0xa8] sm:$0xff]
    %v887 = vld [vmem:[%s12 + $0xb0] sm:$0xff]
    %v888 = vld [vmem:[%s12 + $0xb8] sm:$0xff]
    %v889 = vld [vmem:[%s12 + $0xc0] sm:$0xff]
    %v890 = vld [vmem:[%s12 + $0xc8] sm:$0xff]
    %v891 = vld [vmem:[%s12 + $0xd0] sm:$0xff]
    %v892 = vld [vmem:[%s12 + $0xd8] sm:$0xff]
    %v893 = vld [vmem:[%s12 + $0xe0] sm:$0xff]
    %v894 = vld [vmem:[%s12 + $0xe8] sm:$0xff]
    %v895 = vld [vmem:[%s12 + $0xf0] sm:$0xff]
    %v896 = vld [vmem:[%s12 + $0xf8] sm:$0xff]
    %v897 = vld [vmem:[%s12 + $0x100] sm:$0xff]
    %v898 = vld [vmem:[%s12 + $0x108] sm:$0xff]
    %v899 = vld [vmem:[%s12 + $0x110] sm:$0xff]
    %v900 = vld [vmem:[%s12 + $0x118] sm:$0xff]
    %v901 = vld [vmem:[%s12 + $0x120] sm:$0xff]
    %v902 = vld [vmem:[%s12 + $0x128] sm:$0xff]
    %v903 = vld [vmem:[%s12 + $0x130] sm:$0xff]
    %v904 = vld [vmem:[%s12 + $0x138] sm:$0xff]
    %v905 = vld [vmem:[%s12 + $0x140] sm:$0xff]
    %v906 = vld [vmem:[%s12 + $0x148] sm:$0xff]
    %v907 = vld [vmem:[%s12 + $0x150] sm:$0xff]
    %v908 = vld [vmem:[%s12 + $0x158] sm:$0xff]
    %v909 = vld [vmem:[%s12 + $0x160] sm:$0xff]
    %v910 = vld [vmem:[%s12 + $0x168] sm:$0xff]
    %v911 = vld [vmem:[%s12 + $0x170] sm:$0xff]
    %v912 = vld [vmem:[%s12 + $0x178] sm:$0xff]
    %v913 = vld [vmem:[%s12 + $0x180] sm:$0xff]
    %v914 = vld [vmem:[%s12 + $0x188] sm:$0xff]
    %v915 = vld [vmem:[%s12 + $0x190] sm:$0xff]
    %v916 = vld [vmem:[%s12 + $0x198] sm:$0xff]
    %v917 = vld [vmem:[%s12 + $0x1a0] sm:$0xff]
    %v918 = vld [vmem:[%s12 + $0x1a8] sm:$0xff]
    %v919 = vld [vmem:[%s12 + $0x1b0] sm:$0xff]
    %v920 = vld [vmem:[%s12 + $0x1b8] sm:$0xff]
    %v921 = vld [vmem:[%s12 + $0x1c0] sm:$0xff]
    %v922 = vld [vmem:[%s12 + $0x1c8] sm:$0xff]
    %v923 = vld [vmem:[%s12 + $0x1d0] sm:$0xff]
    %v924 = vld [vmem:[%s12 + $0x1d8] sm:$0xff]
    %v925 = vld [vmem:[%s12 + $0x1e0] sm:$0xff]
    %v926 = vld [vmem:[%s12 + $0x1e8] sm:$0xff]
    %v927 = vld [vmem:[%s12 + $0x1f0] sm:$0xff]
    %v928 = vld [vmem:[%s12 + $0x1f8] sm:$0xff]
    %v929 = vld [vmem:[%s13] sm:$0xf]
    %v931 = vlaneseq
    %v932 = vshrl.u32 %v931, 7
    %v933 = vsub.s32 0, %v932
    %v934 = vrot.slane %v929, %v933
    %v935 = vlaneseq
    %v936 = vshrl.u32 %v935, 7
    %v937 = vsub.s32 1, %v936
    %v938 = vrot.slane %v929, %v937
    %v939 = vlaneseq
    %v940 = vshrl.u32 %v939, 7
    %v941 = vsub.s32 2, %v940
    %v942 = vrot.slane %v929, %v941
    %v943 = vlaneseq
    %v944 = vshrl.u32 %v943, 7
    %v945 = vsub.s32 3, %v944
    %v946 = vrot.slane %v929, %v945
    %951 = vmatprep.subr.mxu0 %v866
    %952 = vmatpush1.msra.mxu0 %v865
    %953 = vmatprep.subr.mxu0 %v870
    %954 = vmatpush1.msra.mxu0 %v869
    %955 = vmatprep.subr.mxu0 %v874
    %956 = vmatpush1.msra.mxu0 %v873
    %957 = vmatprep.subr.mxu0 %v878
    %958 = vmatpush1.msra.mxu0 %v877
    %959 = vmatprep.subr.mxu0 %v882
    %960 = vmatpush1.msra.mxu0 %v881
    %961 = vmatprep.subr.mxu0 %v886
    %962 = vmatpush1.msra.mxu0 %v885
    %963 = vmatprep.subr.mxu0 %v890
    %964 = vmatpush1.msra.mxu0 %v889
    %965 = vmatprep.subr.mxu0 %v894
    %966 = vmatpush1.msra.mxu0 %v893
    %967 = vmatprep.subr.mxu0 %v898
    %968 = vmatpush1.msra.mxu0 %v897
    %969 = vmatprep.subr.mxu0 %v902
    %970 = vmatpush1.msra.mxu0 %v901
    %971 = vmatprep.subr.mxu0 %v906
    %972 = vmatpush1.msra.mxu0 %v905
    %973 = vmatprep.subr.mxu0 %v910
    %974 = vmatpush1.msra.mxu0 %v909
    %975 = vmatprep.subr.mxu0 %v914
    %976 = vmatpush1.msra.mxu0 %v913
    %977 = vmatprep.subr.mxu0 %v918
    %978 = vmatpush1.msra.mxu0 %v917
    %979 = vmatprep.subr.mxu0 %v922
    %980 = vmatpush1.msra.mxu0 %v921
    %981 = vmatprep.subr.mxu0 %v926
    %982 = vmatpush1.msra.mxu0 %v925
    %983 = vmatprep.subr.mxu0 0.0
    %984 = vmatpush1.msra.mxu0 0.0
    %985 = vmatprep.subr.mxu0 0.0
    %986 = vmatpush1.msra.mxu0 0.0
    %987 = vmatprep.subr.mxu0 0.0
    %988 = vmatpush1.msra.mxu0 0.0
    %989 = vmatprep.subr.mxu0 0.0
    %990 = vmatpush1.msra.mxu0 0.0
    %991 = vmatprep.subr.mxu0 0.0
    %992 = vmatpush1.msra.mxu0 0.0
    %993 = vmatprep.subr.mxu0 0.0
    %994 = vmatpush1.msra.mxu0 0.0
    %995 = vmatprep.subr.mxu0 0.0
    %996 = vmatpush1.msra.mxu0 0.0
    %997 = vmatprep.subr.mxu0 0.0
    %998 = vmatpush1.msra.mxu0 0.0
    %999 = vmatprep.subr.mxu0 0.0
    %1000 = vmatpush1.msra.mxu0 0.0
    %1001 = vmatprep.subr.mxu0 0.0
    %1002 = vmatpush1.msra.mxu0 0.0
    %1003 = vmatprep.subr.mxu0 0.0
    %1004 = vmatpush1.msra.mxu0 0.0
    %1005 = vmatprep.subr.mxu0 0.0
    %1006 = vmatpush1.msra.mxu0 0.0
    %1007 = vmatprep.subr.mxu0 0.0
    %1008 = vmatpush1.msra.mxu0 0.0
    %1009 = vmatprep.subr.mxu0 0.0
    %1010 = vmatpush1.msra.mxu0 0.0
    %1011 = vmatprep.subr.mxu0 0.0
    %1012 = vmatpush1.msra.mxu0 0.0
    %1013 = vmatprep.subr.mxu0 0.0
    %1014 = vmatpush1.msra.mxu0 0.0
    %1015 = vmatprep.mubr.f32.mxu0 0.0
    %1016 = vmatmul.mubr.f32.gmra.mrb[0].mxu0 %v864
    %v1017 = vpop.f32.mrb[0].mxu0
    %v1018 = vadd.f32 %v934, %v1017
    %v1019 = vpop.f32.mrb[0].mxu0
    %v1020 = vadd.f32 %v938, %v1019
    %1021 = vdwg.mxu0
    %1022 = vmatprep.subr.mxu0 %v868
    %1023 = vmatpush1.msra.mxu0 %v867
    %1024 = vmatprep.subr.mxu0 %v872
    %1025 = vmatpush1.msra.mxu0 %v871
    %1026 = vmatprep.subr.mxu0 %v876
    %1027 = vmatpush1.msra.mxu0 %v875
    %1028 = vmatprep.subr.mxu0 %v880
    %1029 = vmatpush1.msra.mxu0 %v879
    %1030 = vmatprep.subr.mxu0 %v884
    %1031 = vmatpush1.msra.mxu0 %v883
    %1032 = vmatprep.subr.mxu0 %v888
    %1033 = vmatpush1.msra.mxu0 %v887
    %1034 = vmatprep.subr.mxu0 %v892
    %1035 = vmatpush1.msra.mxu0 %v891
    %1036 = vmatprep.subr.mxu0 %v896
    %1037 = vmatpush1.msra.mxu0 %v895
    %1038 = vmatprep.subr.mxu0 %v900
    %1039 = vmatpush1.msra.mxu0 %v899
    %1040 = vmatprep.subr.mxu0 %v904
    %1041 = vmatpush1.msra.mxu0 %v903
    %1042 = vmatprep.subr.mxu0 %v908
    %1043 = vmatpush1.msra.mxu0 %v907
    %1044 = vmatprep.subr.mxu0 %v912
    %1045 = vmatpush1.msra.mxu0 %v911
    %1046 = vmatprep.subr.mxu0 %v916
    %1047 = vmatpush1.msra.mxu0 %v915
    %1048 = vmatprep.subr.mxu0 %v920
    %1049 = vmatpush1.msra.mxu0 %v919
    %1050 = vmatprep.subr.mxu0 %v924
    %1051 = vmatpush1.msra.mxu0 %v923
    %1052 = vmatprep.subr.mxu0 %v928
    %1053 = vmatpush1.msra.mxu0 %v927
    %1054 = vmatprep.subr.mxu0 0.0
    %1055 = vmatpush1.msra.mxu0 0.0
    %1056 = vmatprep.subr.mxu0 0.0
    %1057 = vmatpush1.msra.mxu0 0.0
    %1058 = vmatprep.subr.mxu0 0.0
    %1059 = vmatpush1.msra.mxu0 0.0
    %1060 = vmatprep.subr.mxu0 0.0
    %1061 = vmatpush1.msra.mxu0 0.0
    %1062 = vmatprep.subr.mxu0 0.0
    %1063 = vmatpush1.msra.mxu0 0.0
    %1064 = vmatprep.subr.mxu0 0.0
    %1065 = vmatpush1.msra.mxu0 0.0
    %1066 = vmatprep.subr.mxu0 0.0
    %1067 = vmatpush1.msra.mxu0 0.0
    %1068 = vmatprep.subr.mxu0 0.0
    %1069 = vmatpush1.msra.mxu0 0.0
    %1070 = vmatprep.subr.mxu0 0.0
    %1071 = vmatpush1.msra.mxu0 0.0
    %1072 = vmatprep.subr.mxu0 0.0
    %1073 = vmatpush1.msra.mxu0 0.0
    %1074 = vmatprep.subr.mxu0 0.0
    %1075 = vmatpush1.msra.mxu0 0.0
    %1076 = vmatprep.subr.mxu0 0.0
    %1077 = vmatpush1.msra.mxu0 0.0
    %1078 = vmatprep.subr.mxu0 0.0
    %1079 = vmatpush1.msra.mxu0 0.0
    %1080 = vmatprep.subr.mxu0 0.0
    %1081 = vmatpush1.msra.mxu0 0.0
    %1082 = vmatprep.subr.mxu0 0.0
    %1083 = vmatpush1.msra.mxu0 0.0
    %1084 = vmatprep.subr.mxu0 0.0
    %1085 = vmatpush1.msra.mxu0 0.0
    %1086 = vmatprep.mubr.f32.mxu0 0.0
    %1087 = vmatmul.mubr.f32.gmra.mrb[0].mxu0 %v864
    %v1088 = vpop.f32.mrb[0].mxu0
    %v1089 = vadd.f32 %v942, %v1088
    %v1090 = vpop.f32.mrb[0].mxu0
    %v1091 = vadd.f32 %v946, %v1090
    %1092 = vdwg.mxu0
    %v1093 = vxor.u32 %v1018, 2147483648
    %v1094 = vmul.f32 %v1093, 1.442695
    %v1095 = vpow.pop %v1094
    %v1096 = vadd.f32 %v1095, 1.0
    %v1097 = vrcp.pop %v1096
    %v1098 = vmul.f32 1.0, %v1097
    %v1099 = vxor.u32 %v1020, 2147483648
    %v1100 = vmul.f32 %v1099, 1.442695
    %v1101 = vpow.pop %v1100
    %v1102 = vadd.f32 %v1101, 1.0
    %v1103 = vrcp.pop %v1102
    %v1104 = vmul.f32 1.0, %v1103
    %v1105 = vmul.f32 %v1098, %v1091
    %v1106 = vadd.f32 %v1089, %v1105
    %v1107 = vtanh.pop %v1106
    %v1108 = vsub.f32 1.0, %v1104
    %v1109 = vmul.f32 %v1108, %v1107
    %v1110 = vmul.f32 %v1104, %v864
    %v1111 = vadd.f32 %v1109, %v1110
    %1112 = vmatprep.subr.mxu0 %v866
    %1113 = vmatpush1.msra.mxu0 %v865
    %1114 = vmatprep.subr.mxu0 %v870
    %1115 = vmatpush1.msra.mxu0 %v869
    %1116 = vmatprep.subr.mxu0 %v874
    %1117 = vmatpush1.msra.mxu0 %v873
    %1118 = vmatprep.subr.mxu0 %v878
    %1119 = vmatpush1.msra.mxu0 %v877
    %1120 = vmatprep.subr.mxu0 %v882
    %1121 = vmatpush1.msra.mxu0 %v881
    %1122 = vmatprep.subr.mxu0 %v886
    %1123 = vmatpush1.msra.mxu0 %v885
    %1124 = vmatprep.subr.mxu0 %v890
    %1125 = vmatpush1.msra.mxu0 %v889
    %1126 = vmatprep.subr.mxu0 %v894
    %1127 = vmatpush1.msra.mxu0 %v893
    %1128 = vmatprep.subr.mxu0 %v898
    %1129 = vmatpush1.msra.mxu0 %v897
    %1130 = vmatprep.subr.mxu0 %v902
    %1131 = vmatpush1.msra.mxu0 %v901
    %1132 = vmatprep.subr.mxu0 %v906
    %1133 = vmatpush1.msra.mxu0 %v905
    %1134 = vmatprep.subr.mxu0 %v910
    %1135 = vmatpush1.msra.mxu0 %v909
    %1136 = vmatprep.subr.mxu0 %v914
    %1137 = vmatpush1.msra.mxu0 %v913
    %1138 = vmatprep.subr.mxu0 %v918
    %1139 = vmatpush1.msra.mxu0 %v917
    %1140 = vmatprep.subr.mxu0 %v922
    %1141 = vmatpush1.msra.mxu0 %v921
    %1142 = vmatprep.subr.mxu0 %v926
    %1143 = vmatpush1.msra.mxu0 %v925
    %1144 = vmatprep.subr.mxu0 0.0
    %1145 = vmatpush1.msra.mxu0 0.0
    %1146 = vmatprep.subr.mxu0 0.0
    %1147 = vmatpush1.msra.mxu0 0.0
    %1148 = vmatprep.subr.mxu0 0.0
    %1149 = vmatpush1.msra.mxu0 0.0
    %1150 = vmatprep.subr.mxu0 0.0
    %1151 = vmatpush1.msra.mxu0 0.0
    %1152 = vmatprep.subr.mxu0 0.0
    %1153 = vmatpush1.msra.mxu0 0.0
    %1154 = vmatprep.subr.mxu0 0.0
    %1155 = vmatpush1.msra.mxu0 0.0
    %1156 = vmatprep.subr.mxu0 0.0
    %1157 = vmatpush1.msra.mxu0 0.0
    %1158 = vmatprep.subr.mxu0 0.0
    %1159 = vmatpush1.msra.mxu0 0.0
    %1160 = vmatprep.subr.mxu0 0.0
    %1161 = vmatpush1.msra.mxu0 0.0
    %1162 = vmatprep.subr.mxu0 0.0
    %1163 = vmatpush1.msra.mxu0 0.0
    %1164 = vmatprep.subr.mxu0 0.0
    %1165 = vmatpush1.msra.mxu0 0.0
    %1166 = vmatprep.subr.mxu0 0.0
    %1167 = vmatpush1.msra.mxu0 0.0
    %1168 = vmatprep.subr.mxu0 0.0
    %1169 = vmatpush1.msra.mxu0 0.0
    %1170 = vmatprep.subr.mxu0 0.0
    %1171 = vmatpush1.msra.mxu0 0.0
    %1172 = vmatprep.subr.mxu0 0.0
    %1173 = vmatpush1.msra.mxu0 0.0
    %1174 = vmatprep.subr.mxu0 0.0
    %1175 = vmatpush1.msra.mxu0 0.0
    %1176 = vmatprep.mubr.f32.mxu0 0.0
    %1177 = vmatmul.mubr.f32.gmra.mrb[0].mxu0 %v1111
    %v1178 = vpop.f32.mrb[0].mxu0
    %v1179 = vadd.f32 %v934, %v1178
    %v1180 = vpop.f32.mrb[0].mxu0
    %v1181 = vadd.f32 %v938, %v1180
    %1182 = vdwg.mxu0
    %1183 = vmatprep.subr.mxu0 %v868
    %1184 = vmatpush1.msra.mxu0 %v867
    %1185 = vmatprep.subr.mxu0 %v872
    %1186 = vmatpush1.msra.mxu0 %v871
    %1187 = vmatprep.subr.mxu0 %v876
    %1188 = vmatpush1.msra.mxu0 %v875
    %1189 = vmatprep.subr.mxu0 %v880
    %1190 = vmatpush1.msra.mxu0 %v879
    %1191 = vmatprep.subr.mxu0 %v884
    %1192 = vmatpush1.msra.mxu0 %v883
    %1193 = vmatprep.subr.mxu0 %v888
    %1194 = vmatpush1.msra.mxu0 %v887
    %1195 = vmatprep.subr.mxu0 %v892
    %1196 = vmatpush1.msra.mxu0 %v891
    %1197 = vmatprep.subr.mxu0 %v896
    %1198 = vmatpush1.msra.mxu0 %v895
    %1199 = vmatprep.subr.mxu0 %v900
    %1200 = vmatpush1.msra.mxu0 %v899
    %1201 = vmatprep.subr.mxu0 %v904
    %1202 = vmatpush1.msra.mxu0 %v903
    %1203 = vmatprep.subr.mxu0 %v908
    %1204 = vmatpush1.msra.mxu0 %v907
    %1205 = vmatprep.subr.mxu0 %v912
    %1206 = vmatpush1.msra.mxu0 %v911
    %1207 = vmatprep.subr.mxu0 %v916
    %1208 = vmatpush1.msra.mxu0 %v915
    %1209 = vmatprep.subr.mxu0 %v920
    %1210 = vmatpush1.msra.mxu0 %v919
    %1211 = vmatprep.subr.mxu0 %v924
    %1212 = vmatpush1.msra.mxu0 %v923
    %1213 = vmatprep.subr.mxu0 %v928
    %1214 = vmatpush1.msra.mxu0 %v927
    %1215 = vmatprep.subr.mxu0 0.0
    %1216 = vmatpush1.msra.mxu0 0.0
    %1217 = vmatprep.subr.mxu0 0.0
    %1218 = vmatpush1.msra.mxu0 0.0
    %1219 = vmatprep.subr.mxu0 0.0
    %1220 = vmatpush1.msra.mxu0 0.0
    %1221 = vmatprep.subr.mxu0 0.0
    %1222 = vmatpush1.msra.mxu0 0.0
    %1223 = vmatprep.subr.mxu0 0.0
    %1224 = vmatpush1.msra.mxu0 0.0
    %1225 = vmatprep.subr.mxu0 0.0
    %1226 = vmatpush1.msra.mxu0 0.0
    %1227 = vmatprep.subr.mxu0 0.0
    %1228 = vmatpush1.msra.mxu0 0.0
    %1229 = vmatprep.subr.mxu0 0.0
    %1230 = vmatpush1.msra.mxu0 0.0
    %1231 = vmatprep.subr.mxu0 0.0
    %1232 = vmatpush1.msra.mxu0 0.0
    %1233 = vmatprep.subr.mxu0 0.0
    %1234 = vmatpush1.msra.mxu0 0.0
    %1235 = vmatprep.subr.mxu0 0.0
    %1236 = vmatpush1.msra.mxu0 0.0
    %1237 = vmatprep.subr.mxu0 0.0
    %1238 = vmatpush1.msra.mxu0 0.0
    %1239 = vmatprep.subr.mxu0 0.0
    %1240 = vmatpush1.msra.mxu0 0.0
    %1241 = vmatprep.subr.mxu0 0.0
    %1242 = vmatpush1.msra.mxu0 0.0
    %1243 = vmatprep.subr.mxu0 0.0
    %1244 = vmatpush1.msra.mxu0 0.0
    %1245 = vmatprep.subr.mxu0 0.0
    %1246 = vmatpush1.msra.mxu0 0.0
    %1247 = vmatprep.mubr.f32.mxu0 0.0
    %1248 = vmatmul.mubr.f32.gmra.mrb[0].mxu0 %v1111
    %v1249 = vpop.f32.mrb[0].mxu0
    %v1250 = vadd.f32 %v942, %v1249
    %v1251 = vpop.f32.mrb[0].mxu0
    %v1252 = vadd.f32 %v946, %v1251
    %1253 = vdwg.mxu0
    %v1254 = vxor.u32 %v1179, 2147483648
    %v1255 = vmul.f32 %v1254, 1.442695
    %v1256 = vpow.pop %v1255
    %v1257 = vadd.f32 %v1256, 1.0
    %v1258 = vrcp.pop %v1257
    %v1259 = vmul.f32 1.0, %v1258
    %v1260 = vxor.u32 %v1181, 2147483648
    %v1261 = vmul.f32 %v1260, 1.442695
    %v1262 = vpow.pop %v1261
    %v1263 = vadd.f32 %v1262, 1.0
    %v1264 = vrcp.pop %v1263
    %v1265 = vmul.f32 1.0, %v1264
    %v1266 = vmul.f32 %v1259, %v1252
    %v1267 = vadd.f32 %v1250, %v1266
    %v1268 = vtanh.pop %v1267
    %v1269 = vsub.f32 1.0, %v1265
    %v1270 = vmul.f32 %v1269, %v1268
    %v1271 = vmul.f32 %v1265, %v1111
    %v1272 = vadd.f32 %v1270, %v1271
    %1273 = vmatprep.subr.mxu0 %v866
    %1274 = vmatpush1.msra.mxu0 %v865
    %1275 = vmatprep.subr.mxu0 %v870
    %1276 = vmatpush1.msra.mxu0 %v869
    %1277 = vmatprep.subr.mxu0 %v874
    %1278 = vmatpush1.msra.mxu0 %v873
    %1279 = vmatprep.subr.mxu0 %v878
    %1280 = vmatpush1.msra.mxu0 %v877
    %1281 = vmatprep.subr.mxu0 %v882
    %1282 = vmatpush1.msra.mxu0 %v881
    %1283 = vmatprep.subr.mxu0 %v886
    %1284 = vmatpush1.msra.mxu0 %v885
    %1285 = vmatprep.subr.mxu0 %v890
    %1286 = vmatpush1.msra.mxu0 %v889
    %1287 = vmatprep.subr.mxu0 %v894
    %1288 = vmatpush1.msra.mxu0 %v893
    %1289 = vmatprep.subr.mxu0 %v898
    %1290 = vmatpush1.msra.mxu0 %v897
    %1291 = vmatprep.subr.mxu0 %v902
    %1292 = vmatpush1.msra.mxu0 %v901
    %1293 = vmatprep.subr.mxu0 %v906
    %1294 = vmatpush1.msra.mxu0 %v905
    %1295 = vmatprep.subr.mxu0 %v910
    %1296 = vmatpush1.msra.mxu0 %v909
    %1297 = vmatprep.subr.mxu0 %v914
    %1298 = vmatpush1.msra.mxu0 %v913
    %1299 = vmatprep.subr.mxu0 %v918
    %1300 = vmatpush1.msra.mxu0 %v917
    %1301 = vmatprep.subr.mxu0 %v922
    %1302 = vmatpush1.msra.mxu0 %v921
    %1303 = vmatprep.subr.mxu0 %v926
    %1304 = vmatpush1.msra.mxu0 %v925
    %1305 = vmatprep.subr.mxu0 0.0
    %1306 = vmatpush1.msra.mxu0 0.0
    %1307 = vmatprep.subr.mxu0 0.0
    %1308 = vmatpush1.msra.mxu0 0.0
    %1309 = vmatprep.subr.mxu0 0.0
    %1310 = vmatpush1.msra.mxu0 0.0
    %1311 = vmatprep.subr.mxu0 0.0
    %1312 = vmatpush1.msra.mxu0 0.0
    %1313 = vmatprep.subr.mxu0 0.0
    %1314 = vmatpush1.msra.mxu0 0.0
    %1315 = vmatprep.subr.mxu0 0.0
    %1316 = vmatpush1.msra.mxu0 0.0
    %1317 = vmatprep.subr.mxu0 0.0
    %1318 = vmatpush1.msra.mxu0 0.0
    %1319 = vmatprep.subr.mxu0 0.0
    %1320 = vmatpush1.msra.mxu0 0.0
    %1321 = vmatprep.subr.mxu0 0.0
    %1322 = vmatpush1.msra.mxu0 0.0
    %1323 = vmatprep.subr.mxu0 0.0
    %1324 = vmatpush1.msra.mxu0 0.0
    %1325 = vmatprep.subr.mxu0 0.0
    %1326 = vmatpush1.msra.mxu0 0.0
    %1327 = vmatprep.subr.mxu0 0.0
    %1328 = vmatpush1.msra.mxu0 0.0
    %1329 = vmatprep.subr.mxu0 0.0
    %1330 = vmatpush1.msra.mxu0 0.0
    %1331 = vmatprep.subr.mxu0 0.0
    %1332 = vmatpush1.msra.mxu0 0.0
    %1333 = vmatprep.subr.mxu0 0.0
    %1334 = vmatpush1.msra.mxu0 0.0
    %1335 = vmatprep.subr.mxu0 0.0
    %1336 = vmatpush1.msra.mxu0 0.0
    %1337 = vmatprep.mubr.f32.mxu0 0.0
    %1338 = vmatmul.mubr.f32.gmra.mrb[0].mxu0 %v1272
    %v1339 = vpop.f32.mrb[0].mxu0
    %v1340 = vadd.f32 %v934, %v1339
    %v1341 = vpop.f32.mrb[0].mxu0
    %v1342 = vadd.f32 %v938, %v1341
    %1343 = vdwg.mxu0
    %1344 = vmatprep.subr.mxu0 %v868
    %1345 = vmatpush1.msra.mxu0 %v867
    %1346 = vmatprep.subr.mxu0 %v872
    %1347 = vmatpush1.msra.mxu0 %v871
    %1348 = vmatprep.subr.mxu0 %v876
    %1349 = vmatpush1.msra.mxu0 %v875
    %1350 = vmatprep.subr.mxu0 %v880
    %1351 = vmatpush1.msra.mxu0 %v879
    %1352 = vmatprep.subr.mxu0 %v884
    %1353 = vmatpush1.msra.mxu0 %v883
    %1354 = vmatprep.subr.mxu0 %v888
    %1355 = vmatpush1.msra.mxu0 %v887
    %1356 = vmatprep.subr.mxu0 %v892
    %1357 = vmatpush1.msra.mxu0 %v891
    %1358 = vmatprep.subr.mxu0 %v896
    %1359 = vmatpush1.msra.mxu0 %v895
    %1360 = vmatprep.subr.mxu0 %v900
    %1361 = vmatpush1.msra.mxu0 %v899
    %1362 = vmatprep.subr.mxu0 %v904
    %1363 = vmatpush1.msra.mxu0 %v903
    %1364 = vmatprep.subr.mxu0 %v908
    %1365 = vmatpush1.msra.mxu0 %v907
    %1366 = vmatprep.subr.mxu0 %v912
    %1367 = vmatpush1.msra.mxu0 %v911
    %1368 = vmatprep.subr.mxu0 %v916
    %1369 = vmatpush1.msra.mxu0 %v915
    %1370 = vmatprep.subr.mxu0 %v920
    %1371 = vmatpush1.msra.mxu0 %v919
    %1372 = vmatprep.subr.mxu0 %v924
    %1373 = vmatpush1.msra.mxu0 %v923
    %1374 = vmatprep.subr.mxu0 %v928
    %1375 = vmatpush1.msra.mxu0 %v927
    %1376 = vmatprep.subr.mxu0 0.0
    %1377 = vmatpush1.msra.mxu0 0.0
    %1378 = vmatprep.subr.mxu0 0.0
    %1379 = vmatpush1.msra.mxu0 0.0
    %1380 = vmatprep.subr.mxu0 0.0
    %1381 = vmatpush1.msra.mxu0 0.0
    %1382 = vmatprep.subr.mxu0 0.0
    %1383 = vmatpush1.msra.mxu0 0.0
    %1384 = vmatprep.subr.mxu0 0.0
    %1385 = vmatpush1.msra.mxu0 0.0
    %1386 = vmatprep.subr.mxu0 0.0
    %1387 = vmatpush1.msra.mxu0 0.0
    %1388 = vmatprep.subr.mxu0 0.0
    %1389 = vmatpush1.msra.mxu0 0.0
    %1390 = vmatprep.subr.mxu0 0.0
    %1391 = vmatpush1.msra.mxu0 0.0
    %1392 = vmatprep.subr.mxu0 0.0
    %1393 = vmatpush1.msra.mxu0 0.0
    %1394 = vmatprep.subr.mxu0 0.0
    %1395 = vmatpush1.msra.mxu0 0.0
    %1396 = vmatprep.subr.mxu0 0.0
    %1397 = vmatpush1.msra.mxu0 0.0
    %1398 = vmatprep.subr.mxu0 0.0
    %1399 = vmatpush1.msra.mxu0 0.0
    %1400 = vmatprep.subr.mxu0 0.0
    %1401 = vmatpush1.msra.mxu0 0.0
    %1402 = vmatprep.subr.mxu0 0.0
    %1403 = vmatpush1.msra.mxu0 0.0
    %1404 = vmatprep.subr.mxu0 0.0
    %1405 = vmatpush1.msra.mxu0 0.0
    %1406 = vmatprep.subr.mxu0 0.0
    %1407 = vmatpush1.msra.mxu0 0.0
    %1408 = vmatprep.mubr.f32.mxu0 0.0
    %1409 = vmatmul.mubr.f32.gmra.mrb[0].mxu0 %v1272
    %v1410 = vpop.f32.mrb[0].mxu0
    %v1411 = vadd.f32 %v942, %v1410
    %v1412 = vpop.f32.mrb[0].mxu0
    %v1413 = vadd.f32 %v946, %v1412
    %1414 = vdwg.mxu0
    %v1415 = vxor.u32 %v1340, 2147483648
    %v1416 = vmul.f32 %v1415, 1.442695
    %v1417 = vpow.pop %v1416
    %v1418 = vadd.f32 %v1417, 1.0
    %v1419 = vrcp.pop %v1418
    %v1420 = vmul.f32 1.0, %v1419
    %v1421 = vxor.u32 %v1342, 2147483648
    %v1422 = vmul.f32 %v1421, 1.442695
    %v1423 = vpow.pop %v1422
    %v1424 = vadd.f32 %v1423, 1.0
    %v1425 = vrcp.pop %v1424
    %v1426 = vmul.f32 1.0, %v1425
    %v1427 = vmul.f32 %v1420, %v1413
    %v1428 = vadd.f32 %v1411, %v1427
    %v1429 = vtanh.pop %v1428
    %v1430 = vsub.f32 1.0, %v1426
    %v1431 = vmul.f32 %v1430, %v1429
    %v1432 = vmul.f32 %v1426, %v1272
    %v1433 = vadd.f32 %v1431, %v1432
    %1434 = vmatprep.subr.mxu0 %v866
    %1435 = vmatpush1.msra.mxu0 %v865
    %1436 = vmatprep.subr.mxu0 %v870
    %1437 = vmatpush1.msra.mxu0 %v869
    %1438 = vmatprep.subr.mxu0 %v874
    %1439 = vmatpush1.msra.mxu0 %v873
    %1440 = vmatprep.subr.mxu0 %v878
    %1441 = vmatpush1.msra.mxu0 %v877
    %1442 = vmatprep.subr.mxu0 %v882
    %1443 = vmatpush1.msra.mxu0 %v881
    %1444 = vmatprep.subr.mxu0 %v886
    %1445 = vmatpush1.msra.mxu0 %v885
    %1446 = vmatprep.subr.mxu0 %v890
    %1447 = vmatpush1.msra.mxu0 %v889
    %1448 = vmatprep.subr.mxu0 %v894
    %1449 = vmatpush1.msra.mxu0 %v893
    %1450 = vmatprep.subr.mxu0 %v898
    %1451 = vmatpush1.msra.mxu0 %v897
    %1452 = vmatprep.subr.mxu0 %v902
    %1453 = vmatpush1.msra.mxu0 %v901
    %1454 = vmatprep.subr.mxu0 %v906
    %1455 = vmatpush1.msra.mxu0 %v905
    %1456 = vmatprep.subr.mxu0 %v910
    %1457 = vmatpush1.msra.mxu0 %v909
    %1458 = vmatprep.subr.mxu0 %v914
    %1459 = vmatpush1.msra.mxu0 %v913
    %1460 = vmatprep.subr.mxu0 %v918
    %1461 = vmatpush1.msra.mxu0 %v917
    %1462 = vmatprep.subr.mxu0 %v922
    %1463 = vmatpush1.msra.mxu0 %v921
    %1464 = vmatprep.subr.mxu0 %v926
    %1465 = vmatpush1.msra.mxu0 %v925
    %1466 = vmatprep.subr.mxu0 0.0
    %1467 = vmatpush1.msra.mxu0 0.0
    %1468 = vmatprep.subr.mxu0 0.0
    %1469 = vmatpush1.msra.mxu0 0.0
    %1470 = vmatprep.subr.mxu0 0.0
    %1471 = vmatpush1.msra.mxu0 0.0
    %1472 = vmatprep.subr.mxu0 0.0
    %1473 = vmatpush1.msra.mxu0 0.0
    %1474 = vmatprep.subr.mxu0 0.0
    %1475 = vmatpush1.msra.mxu0 0.0
    %1476 = vmatprep.subr.mxu0 0.0
    %1477 = vmatpush1.msra.mxu0 0.0
    %1478 = vmatprep.subr.mxu0 0.0
    %1479 = vmatpush1.msra.mxu0 0.0
    %1480 = vmatprep.subr.mxu0 0.0
    %1481 = vmatpush1.msra.mxu0 0.0
    %1482 = vmatprep.subr.mxu0 0.0
    %1483 = vmatpush1.msra.mxu0 0.0
    %1484 = vmatprep.subr.mxu0 0.0
    %1485 = vmatpush1.msra.mxu0 0.0
    %1486 = vmatprep.subr.mxu0 0.0
    %1487 = vmatpush1.msra.mxu0 0.0
    %1488 = vmatprep.subr.mxu0 0.0
    %1489 = vmatpush1.msra.mxu0 0.0
    %1490 = vmatprep.subr.mxu0 0.0
    %1491 = vmatpush1.msra.mxu0 0.0
    %1492 = vmatprep.subr.mxu0 0.0
    %1493 = vmatpush1.msra.mxu0 0.0
    %1494 = vmatprep.subr.mxu0 0.0
    %1495 = vmatpush1.msra.mxu0 0.0
    %1496 = vmatprep.subr.mxu0 0.0
    %1497 = vmatpush1.msra.mxu0 0.0
    %1498 = vmatprep.mubr.f32.mxu0 0.0
    %1499 = vmatmul.mubr.f32.gmra.mrb[0].mxu0 %v1433
    %v1500 = vpop.f32.mrb[0].mxu0
    %v1501 = vadd.f32 %v934, %v1500
    %v1502 = vpop.f32.mrb[0].mxu0
    %v1503 = vadd.f32 %v938, %v1502
    %1504 = vdwg.mxu0
    %1505 = vmatprep.subr.mxu0 %v868
    %1506 = vmatpush1.msra.mxu0 %v867
    %1507 = vmatprep.subr.mxu0 %v872
    %1508 = vmatpush1.msra.mxu0 %v871
    %1509 = vmatprep.subr.mxu0 %v876
    %1510 = vmatpush1.msra.mxu0 %v875
    %1511 = vmatprep.subr.mxu0 %v880
    %1512 = vmatpush1.msra.mxu0 %v879
    %1513 = vmatprep.subr.mxu0 %v884
    %1514 = vmatpush1.msra.mxu0 %v883
    %1515 = vmatprep.subr.mxu0 %v888
    %1516 = vmatpush1.msra.mxu0 %v887
    %1517 = vmatprep.subr.mxu0 %v892
    %1518 = vmatpush1.msra.mxu0 %v891
    %1519 = vmatprep.subr.mxu0 %v896
    %1520 = vmatpush1.msra.mxu0 %v895
    %1521 = vmatprep.subr.mxu0 %v900
    %1522 = vmatpush1.msra.mxu0 %v899
    %1523 = vmatprep.subr.mxu0 %v904
    %1524 = vmatpush1.msra.mxu0 %v903
    %1525 = vmatprep.subr.mxu0 %v908
    %1526 = vmatpush1.msra.mxu0 %v907
    %1527 = vmatprep.subr.mxu0 %v912
    %1528 = vmatpush1.msra.mxu0 %v911
    %1529 = vmatprep.subr.mxu0 %v916
    %1530 = vmatpush1.msra.mxu0 %v915
    %1531 = vmatprep.subr.mxu0 %v920
    %1532 = vmatpush1.msra.mxu0 %v919
    %1533 = vmatprep.subr.mxu0 %v924
    %1534 = vmatpush1.msra.mxu0 %v923
    %1535 = vmatprep.subr.mxu0 %v928
    %1536 = vmatpush1.msra.mxu0 %v927
    %1537 = vmatprep.subr.mxu0 0.0
    %1538 = vmatpush1.msra.mxu0 0.0
    %1539 = vmatprep.subr.mxu0 0.0
    %1540 = vmatpush1.msra.mxu0 0.0
    %1541 = vmatprep.subr.mxu0 0.0
    %1542 = vmatpush1.msra.mxu0 0.0
    %1543 = vmatprep.subr.mxu0 0.0
    %1544 = vmatpush1.msra.mxu0 0.0
    %1545 = vmatprep.subr.mxu0 0.0
    %1546 = vmatpush1.msra.mxu0 0.0
    %1547 = vmatprep.subr.mxu0 0.0
    %1548 = vmatpush1.msra.mxu0 0.0
    %1549 = vmatprep.subr.mxu0 0.0
    %1550 = vmatpush1.msra.mxu0 0.0
    %1551 = vmatprep.subr.mxu0 0.0
    %1552 = vmatpush1.msra.mxu0 0.0
    %1553 = vmatprep.subr.mxu0 0.0
    %1554 = vmatpush1.msra.mxu0 0.0
    %1555 = vmatprep.subr.mxu0 0.0
    %1556 = vmatpush1.msra.mxu0 0.0
    %1557 = vmatprep.subr.mxu0 0.0
    %1558 = vmatpush1.msra.mxu0 0.0
    %1559 = vmatprep.subr.mxu0 0.0
    %1560 = vmatpush1.msra.mxu0 0.0
    %1561 = vmatprep.subr.mxu0 0.0
    %1562 = vmatpush1.msra.mxu0 0.0
    %1563 = vmatprep.subr.mxu0 0.0
    %1564 = vmatpush1.msra.mxu0 0.0
    %1565 = vmatprep.subr.mxu0 0.0
    %1566 = vmatpush1.msra.mxu0 0.0
    %1567 = vmatprep.subr.mxu0 0.0
    %1568 = vmatpush1.msra.mxu0 0.0
    %1569 = vmatprep.mubr.f32.mxu0 0.0
    %1570 = vmatmul.mubr.f32.gmra.mrb[0].mxu0 %v1433
    %v1571 = vpop.f32.mrb[0].mxu0
    %v1572 = vadd.f32 %v942, %v1571
    %v1573 = vpop.f32.mrb[0].mxu0
    %v1574 = vadd.f32 %v946, %v1573
    %1575 = vdwg.mxu0
    %v1576 = vxor.u32 %v1501, 2147483648
    %v1577 = vmul.f32 %v1576, 1.442695
    %v1578 = vpow.pop %v1577
    %v1579 = vadd.f32 %v1578, 1.0
    %v1580 = vrcp.pop %v1579
    %v1581 = vmul.f32 1.0, %v1580
    %v1582 = vxor.u32 %v1503, 2147483648
    %v1583 = vmul.f32 %v1582, 1.442695
    %v1584 = vpow.pop %v1583
    %v1585 = vadd.f32 %v1584, 1.0
    %v1586 = vrcp.pop %v1585
    %v1587 = vmul.f32 1.0, %v1586
    %v1588 = vmul.f32 %v1581, %v1574
    %v1589 = vadd.f32 %v1572, %v1588
    %v1590 = vtanh.pop %v1589
    %v1591 = vsub.f32 1.0, %v1587
    %v1592 = vmul.f32 %v1591, %v1590
    %v1593 = vmul.f32 %v1587, %v1433
    %v1594 = vadd.f32 %v1592, %v1593
    %v1595 = vld [vmem:[%s14] sm:$0xff]
    %v1596 = vld [vmem:[%s14 + $0x8] sm:$0xff]
    %v1597 = vld [vmem:[%s14 + $0x10] sm:$0xff]
    %v1598 = vld [vmem:[%s14 + $0x18] sm:$0xff]
    %v1599 = vld [vmem:[%s14 + $0x20] sm:$0xff]
    %v1600 = vld [vmem:[%s14 + $0x28] sm:$0xff]
    %v1601 = vld [vmem:[%s14 + $0x30] sm:$0xff]
    %v1602 = vld [vmem:[%s14 + $0x38] sm:$0xff]
    %v1603 = vld [vmem:[%s14 + $0x40] sm:$0xff]
    %v1604 = vld [vmem:[%s14 + $0x48] sm:$0xff]
    %v1605 = vld [vmem:[%s14 + $0x50] sm:$0xff]
    %v1606 = vld [vmem:[%s14 + $0x58] sm:$0xff]
    %v1607 = vld [vmem:[%s14 + $0x60] sm:$0xff]
    %v1608 = vld [vmem:[%s14 + $0x68] sm:$0xff]
    %v1609 = vld [vmem:[%s14 + $0x70] sm:$0xff]
    %v1610 = vld [vmem:[%s14 + $0x78] sm:$0xff]
    %v1611 = vld [vmem:[%s15] sm:$0x1]
    %1612 = vmatprep.subr.mxu0 0.0
    %1613 = vmatpush1.msra.mxu0 %v1595
    %1614 = vmatprep.subr.mxu0 0.0
    %1615 = vmatpush1.msra.mxu0 %v1596
    %1616 = vmatprep.subr.mxu0 0.0
    %1617 = vmatpush1.msra.mxu0 %v1597
    %1618 = vmatprep.subr.mxu0 0.0
    %1619 = vmatpush1.msra.mxu0 %v1598
    %1620 = vmatprep.subr.mxu0 0.0
    %1621 = vmatpush1.msra.mxu0 %v1599
    %1622 = vmatprep.subr.mxu0 0.0
    %1623 = vmatpush1.msra.mxu0 %v1600
    %1624 = vmatprep.subr.mxu0 0.0
    %1625 = vmatpush1.msra.mxu0 %v1601
    %1626 = vmatprep.subr.mxu0 0.0
    %1627 = vmatpush1.msra.mxu0 %v1602
    %1628 = vmatprep.subr.mxu0 0.0
    %1629 = vmatpush1.msra.mxu0 %v1603
    %1630 = vmatprep.subr.mxu0 0.0
    %1631 = vmatpush1.msra.mxu0 %v1604
    %1632 = vmatprep.subr.mxu0 0.0
    %1633 = vmatpush1.msra.mxu0 %v1605
    %1634 = vmatprep.subr.mxu0 0.0
    %1635 = vmatpush1.msra.mxu0 %v1606
    %1636 = vmatprep.subr.mxu0 0.0
    %1637 = vmatpush1.msra.mxu0 %v1607
    %1638 = vmatprep.subr.mxu0 0.0
    %1639 = vmatpush1.msra.mxu0 %v1608
    %1640 = vmatprep.subr.mxu0 0.0
    %1641 = vmatpush1.msra.mxu0 %v1609
    %1642 = vmatprep.subr.mxu0 0.0
    %1643 = vmatpush1.msra.mxu0 %v1610
    %1644 = vmatprep.subr.mxu0 0.0
    %1645 = vmatpush1.msra.mxu0 0.0
    %1646 = vmatprep.subr.mxu0 0.0
    %1647 = vmatpush1.msra.mxu0 0.0
    %1648 = vmatprep.subr.mxu0 0.0
    %1649 = vmatpush1.msra.mxu0 0.0
    %1650 = vmatprep.subr.mxu0 0.0
    %1651 = vmatpush1.msra.mxu0 0.0
    %1652 = vmatprep.subr.mxu0 0.0
    %1653 = vmatpush1.msra.mxu0 0.0
    %1654 = vmatprep.subr.mxu0 0.0
    %1655 = vmatpush1.msra.mxu0 0.0
    %1656 = vmatprep.subr.mxu0 0.0
    %1657 = vmatpush1.msra.mxu0 0.0
    %1658 = vmatprep.subr.mxu0 0.0
    %1659 = vmatpush1.msra.mxu0 0.0
    %1660 = vmatprep.subr.mxu0 0.0
    %1661 = vmatpush1.msra.mxu0 0.0
    %1662 = vmatprep.subr.mxu0 0.0
    %1663 = vmatpush1.msra.mxu0 0.0
    %1664 = vmatprep.subr.mxu0 0.0
    %1665 = vmatpush1.msra.mxu0 0.0
    %1666 = vmatprep.subr.mxu0 0.0
    %1667 = vmatpush1.msra.mxu0 0.0
    %1668 = vmatprep.subr.mxu0 0.0
    %1669 = vmatpush1.msra.mxu0 0.0
    %1670 = vmatprep.subr.mxu0 0.0
    %1671 = vmatpush1.msra.mxu0 0.0
    %1672 = vmatprep.subr.mxu0 0.0
    %1673 = vmatpush1.msra.mxu0 0.0
    %1674 = vmatprep.subr.mxu0 0.0
    %1675 = vmatpush1.msra.mxu0 0.0
    %1676 = vmatprep.mubr.f32.mxu0 0.0
    %1677 = vmatmul.mubr.f32.gmra.mrb[0].mxu0 %v1594
    %v1678 = vpop.f32.mrb[0].mxu0
    %v1679 = vadd.f32 %v1611, %v1678
    %v1680 = vpop.f32.mrb[0].mxu0
    %1681 = vdwg.mxu0
    %vm1682 = vcmask 516096
    %v1683 = vsel %vm1682, %v1679, -inf
    %1684 = vmax.xlane.f32.xlu0 %v1683
    %v1685 = vpop.xlane.xlu0 %1684
    %v1686 = vsub.f32 %v1679, %v1685
    %v1687 = vmul.f32 %v1686, 1.442695
    %v1688 = vpow.pop %v1687
    %v1689 = vsel %vm1682, %v1688, 0.0
    %1690 = vadd.xlane.f32.xlu0 %v1689
    %v1691 = vpop.xlane.xlu0 %1690
    %v1692 = vlog2.pop %v1691
    %v1693 = vmul.f32 %v1692, 0.6931472
    %v1694 = vsub.f32 %v1686, %v1693
    %1695 = vst.msk [vmem:[#allocation12] sm:$0x1] %vm1682, %v1694
    %1696 = vst [vmem:[#allocation13] sm:$0x1] %v1594
    %1697 = vst.msk [vmem:[#allocation15] sm:$0x1] %vm231, %v242
    // Predicated region
    $region78: #{tpu_custom_call.1} parent=1 // pred_check
      _
    $region79: #{tpu_custom_call.1} parent=1 // pred_check_branch
      %1699 = sbr.rel (0) target = $region81
    $region80: #{tpu_custom_call.1} parent=1 // pred_region
      %s1701 = ssub.s32 16, 16
      %1702 = vsyncadd [#allocation6], %s1701
      %s1704 = sshll.u32 [#allocation12], 4
      %s1705 = int_to_ptr.vmem [resolvable:$true] %s1704
      %1707 = dma.vmem_to_hbm [thread:$0]  %s1705, 16, %s16, [#allocation6]
    $region81: #{tpu_custom_call.1} parent=1 // pred_fallthru
      _
    // Predicated region
    $region82: #{tpu_custom_call.1} parent=1 // pred_check
      _
    $region83: #{tpu_custom_call.1} parent=1 // pred_check_branch
      %1709 = sbr.rel (0) target = $region85
    $region84: #{tpu_custom_call.1} parent=1 // pred_region
      %s1711 = ssub.s32 16, 16
      %1712 = vsyncadd [#allocation14], %s1711
      %s1714 = sshll.u32 [#allocation13], 4
      %s1715 = int_to_ptr.vmem [resolvable:$true] %s1714
      %1717 = dma.vmem_to_hbm [thread:$0]  %s1715, 16, %s17, [#allocation14]
    $region85: #{tpu_custom_call.1} parent=1 // pred_fallthru
      _
    // Predicated region
    $region86: #{tpu_custom_call.1} parent=1 // pred_check
      _
    $region87: #{tpu_custom_call.1} parent=1 // pred_check_branch
      %1719 = sbr.rel (0) target = $region89
    $region88: #{tpu_custom_call.1} parent=1 // pred_region
      %s1721 = ssub.s32 16, 16
      %1722 = vsyncadd [#allocation14], %s1721
      %s1724 = sshll.u32 [#allocation15], 4
      %s1725 = int_to_ptr.vmem [resolvable:$true] %s1724
      %1727 = dma.vmem_to_hbm [thread:$0]  %s1725, 16, %s18, [#allocation14]
    $region89: #{tpu_custom_call.1} parent=1 // pred_fallthru
      _
    // Predicated region
    $region90: #{tpu_custom_call.1} parent=1 // pred_check
      _
    $region91: #{tpu_custom_call.1} parent=1 // pred_check_branch
      %1729 = sbr.rel (0) target = $region93
    $region92: #{tpu_custom_call.1} parent=1 // pred_region
      %1730 = dma.done [#allocation6], 16
    $region93: #{tpu_custom_call.1} parent=1 // pred_fallthru
      _
    // Predicated region
    $region94: #{tpu_custom_call.1} parent=1 // pred_check
      _
    $region95: #{tpu_custom_call.1} parent=1 // pred_check_branch
      %1732 = sbr.rel (0) target = $region97
    $region96: #{tpu_custom_call.1} parent=1 // pred_region
      %1733 = dma.done [#allocation14], 16
    $region97: #{tpu_custom_call.1} parent=1 // pred_fallthru
      _
    // Predicated region
    $region98: #{tpu_custom_call.1} parent=1 // pred_check
      _
    $region99: #{tpu_custom_call.1} parent=1 // pred_check_branch
      %1735 = sbr.rel (0) target = $region101
    $region100: #{tpu_custom_call.1} parent=1 // pred_region
      %1736 = dma.done [#allocation14], 16
    $region101: #{tpu_custom_call.1} parent=1 // pred_fallthru
      _
    %1737 = vsyncpa [#allocation5], 1
    %1738 = vsyncpa [#allocation8], 1
    %1739 = vsyncpa [#allocation11], 1
    %1740 = vsyncpa [#allocation6], 1
    %1741 = vsyncpa [#allocation14], 1

</llo_original>
